<compile_context>
chip_gen: v5e
topology: v5e:2x2
jax: 0.10.0
libtpu: 0.0.40
codegen_flags: <defaults>
</compile_context>

<pallas_src>
import functools

import jax
import jax.numpy as jnp
from jax.experimental import pallas as pl
from jax.experimental.pallas import tpu as pltpu


def _round_up(x, m):
    return ((x + m - 1) // m) * m


def _conv_bn_lrelu_kernel(a_ref, b_ref, w01_ref, w2_ref, shift_ref, o_ref,
                          *, tr, wo, cin):
    """Fused 3x3/stride-2 conv + BN shift + LeakyReLU(0.1) for `tr` output rows.

    a_ref:     (2*tr, wo+1, 2*cin) bf16  column-paired padded input rows
                                          [2*r0, 2*r0 + 2*tr) of this tile.
    b_ref:     (wo+1, 2*cin)       bf16  halo row 2*r0 + 2*tr (kh=2 tap of the
                                          tile's last output row).
    w01_ref:   (3, 2*cin, Cout_pad) bf16  weights for kw in {0,1} (BN folded).
    w2_ref:    (3, cin, Cout_pad)   bf16  weights for kw == 2 (BN folded).
    shift_ref: (1, Cout_pad)        f32   BN shift = beta - mean * scale.
    o_ref:     (tr, wo, Cout_pad)   bf16  output tile (lane-dense Cout_pad).
    """
    shift = shift_ref[...]
    for j in range(tr):                      # static unroll over output rows
        acc = jnp.zeros(o_ref.shape[1:], jnp.float32)
        for kh in range(3):
            d = 2 * j + kh                   # padded input row offset in tile
            if d < 2 * tr:
                tap01 = a_ref[d, 0:wo, :]            # cols {2c, 2c+1}
                tap2 = a_ref[d, 1:wo + 1, 0:cin]     # col  2c+2
            else:                            # halo row (only j==tr-1, kh==2)
                tap01 = b_ref[0:wo, :]
                tap2 = b_ref[1:wo + 1, 0:cin]
            acc += jnp.dot(tap01, w01_ref[kh],
                           preferred_element_type=jnp.float32)
            acc += jnp.dot(tap2, w2_ref[kh],
                           preferred_element_type=jnp.float32)
        y = acc + shift
        o_ref[j] = jnp.maximum(y, 0.1 * y).astype(o_ref.dtype)   # LeakyReLU(0.1)


@functools.partial(jax.jit, static_argnames=("eps", "tr"))
def downsampling_forward(x_nchw, conv_w, gamma, beta, run_mean, run_var,
                         eps=1e-5, tr=8):
    """DownSampling forward.  x_nchw: (N, Cin, H, W), conv_w: (Cout, Cin, 3, 3)."""
    N, Cin, H, W = x_nchw.shape
    Cout = conv_w.shape[0]
    Ho = (H + 2 - 3) // 2 + 1
    Wo = (W + 2 - 3) // 2 + 1

    # ---- row-tile selection ----------------------------------------------
    tr = max(1, min(tr, Ho))
    if N * pl.cdiv(Ho, tr) < 2:          # keep >=2 grid tiles so v7x's two
        tr = max(1, pl.cdiv(Ho, 2))      # TensorCores both get work
    n_tiles = pl.cdiv(Ho, tr)
    Ho_pad = n_tiles * tr
    Cout_pad = _round_up(Cout, 128)      # lane-dense output stores

    # Padded geometry: rows cover every tap of every (possibly padded) output
    # row plus the +1-block halo view; cols padded to an even count so the
    # stride-2 column taps fold into channels as a free reshape.
    Hp_pad = 2 * tr * (n_tiles + 1)
    Wp_pad = 2 * (Wo + 1)

    # ---- glue: NCHW -> NHWC bf16, zero-pad, fold column pairs into channels
    x = jnp.transpose(x_nchw, (0, 2, 3, 1)).astype(jnp.bfloat16)    # (N,H,W,Cin)
    x = jnp.pad(x, ((0, 0), (1, Hp_pad - 1 - H), (1, Wp_pad - 1 - W), (0, 0)))
    x = x.reshape(N, Hp_pad, Wo + 1, 2 * Cin)   # (col pair, [col parity, Cin])

    # ---- fold BN scale into the conv weight; keep only the per-ch shift ----
    inv_std = gamma.astype(jnp.float32) / jnp.sqrt(
        run_var.astype(jnp.float32) + eps)                           # (Cout,)
    shift = beta.astype(jnp.float32) - run_mean.astype(jnp.float32) * inv_std
    wf = jnp.transpose(conv_w.astype(jnp.float32), (2, 3, 1, 0))     # (kh,kw,Cin,Cout)
    wf = wf * inv_std[None, None, None, :]
    wf = jnp.pad(wf, ((0, 0), (0, 0), (0, 0), (0, Cout_pad - Cout)))
    w01 = wf[:, 0:2].reshape(3, 2 * Cin, Cout_pad).astype(jnp.bfloat16)
    w2 = wf[:, 2].astype(jnp.bfloat16)                               # (3,Cin,Cout_pad)
    shift = jnp.pad(shift, (0, Cout_pad - Cout)).reshape(1, Cout_pad)
    shift = shift.astype(jnp.float32)

    # ---- fused conv + BN shift + LeakyReLU kernel --------------------------
    kernel = functools.partial(_conv_bn_lrelu_kernel, tr=tr, wo=Wo, cin=Cin)
    out = pl.pallas_call(
        kernel,
        out_shape=jax.ShapeDtypeStruct((N, Ho_pad, Wo, Cout_pad), jnp.bfloat16),
        grid_spec=pltpu.PrefetchScalarGridSpec(
            num_scalar_prefetch=0,
            grid=(N, n_tiles),
            in_specs=[
                # tile body: padded rows [2*tr*i, 2*tr*(i+1))
                pl.BlockSpec((None, 2 * tr, Wo + 1, 2 * Cin),
                             lambda n, i: (n, i, 0, 0)),
                # halo row 2*tr*(i+1) (same array, single-row view)
                pl.BlockSpec((None, None, Wo + 1, 2 * Cin),
                             lambda n, i: (n, 2 * tr * (i + 1), 0, 0)),
                # weights & BN shift: constant index maps -> resident in VMEM
                pl.BlockSpec((3, 2 * Cin, Cout_pad), lambda n, i: (0, 0, 0)),
                pl.BlockSpec((3, Cin, Cout_pad), lambda n, i: (0, 0, 0)),
                pl.BlockSpec((1, Cout_pad), lambda n, i: (0, 0)),
            ],
            out_specs=pl.BlockSpec((None, tr, Wo, Cout_pad),
                                   lambda n, i: (n, i, 0, 0)),
        ),
        compiler_params=pltpu.CompilerParams(
            dimension_semantics=("parallel", "parallel")),
    )(x, x, w01, w2, shift)

    # TODO(synk): drop this output-sized transpose/cast pass if downstream
    # consumers can take NHWC / bf16 directly.
    out = out[:, :Ho, :, :Cout]                                      # drop padding
    return jnp.transpose(out, (0, 3, 1, 2)).astype(jnp.float32)      # NCHW f32


def _reference(x_nchw, conv_w, gamma, beta, run_mean, run_var, eps=1e-5):
    y = jax.lax.conv_general_dilated(
        x_nchw.astype(jnp.float32), conv_w.astype(jnp.float32),
        window_strides=(2, 2), padding=((1, 1), (1, 1)),
        dimension_numbers=("NCHW", "OIHW", "NCHW"))
    s = (gamma / jnp.sqrt(run_var + eps)).reshape(1, -1, 1, 1)
    b = (beta - run_mean * gamma / jnp.sqrt(run_var + eps)).reshape(1, -1, 1, 1)
    y = y * s + b
    return jnp.where(y > 0, y, 0.1 * y)


if __name__ == "__main__":
    key = jax.random.PRNGKey(0)
    k_x, k_w, k_g, k_b, k_m, k_v = jax.random.split(key, 6)

    N, Cin, H, W = 2, 4, 16, 16
    Cout = 8

    x = jax.random.normal(k_x, (N, Cin, H, W), dtype=jnp.float32)

    # deterministic, in-script parameter init (synthetic weights, no checkpoint)
    conv_w = 0.1 * jax.random.normal(k_w, (Cout, Cin, 3, 3), dtype=jnp.float32)
    gamma = 1.0 + 0.05 * jax.random.normal(k_g, (Cout,), dtype=jnp.float32)
    beta = 0.05 * jax.random.normal(k_b, (Cout,), dtype=jnp.float32)
    run_mean = 0.1 * jax.random.normal(k_m, (Cout,), dtype=jnp.float32)
    run_var = jnp.abs(1.0 + 0.1 * jax.random.normal(k_v, (Cout,), dtype=jnp.float32))

    out = downsampling_forward(x, conv_w, gamma, beta, run_mean, run_var)
    out = jax.block_until_ready(out)

    ref = _reference(x, conv_w, gamma, beta, run_mean, run_var)
    assert out.shape == (N, Cout, H // 2, W // 2), out.shape
    # bf16 MXU operands vs f32 reference -> relaxed tolerance
    assert jnp.allclose(out, ref, atol=5e-2, rtol=5e-2), "mismatch vs reference"

    print("KERNEL_OK")
</pallas_src>

<mosaic_0001>
module attributes {stable_mosaic.version = 11 : i64} {
  func.func @_conv_bn_lrelu_kernel(%arg0: i32, %arg1: i32, %arg2: memref<1x16x9x8xbf16, #tpu.memory_space<vmem>>, %arg3: memref<1x1x9x8xbf16, #tpu.memory_space<vmem>>, %arg4: memref<3x8x128xbf16, #tpu.memory_space<vmem>>, %arg5: memref<3x4x128xbf16, #tpu.memory_space<vmem>>, %arg6: memref<1x128xf32, #tpu.memory_space<vmem>>, %arg7: memref<1x8x8x128xbf16, #tpu.memory_space<vmem>>) attributes {dimension_semantics = [#tpu.dimension_semantics<parallel>, #tpu.dimension_semantics<parallel>], iteration_bounds = array<i64: 2, 1>, scalar_prefetch = 0 : i64, scratch_operands = 0 : i64, tpu.core_type = #tpu.core_type<tc>, window_params = [{transform_indices = @transform_0, window_bounds = array<i64: 1, 16, 9, 8>}, {transform_indices = @transform_1, window_bounds = array<i64: 1, 1, 9, 8>}, {pipeline_mode = #tpu.pipeline_mode<synchronous>, transform_indices = @transform_2, window_bounds = array<i64: 3, 8, 128>}, {pipeline_mode = #tpu.pipeline_mode<synchronous>, transform_indices = @transform_3, window_bounds = array<i64: 3, 4, 128>}, {pipeline_mode = #tpu.pipeline_mode<synchronous>, transform_indices = @transform_4, window_bounds = array<i64: 1, 128>}, {transform_indices = @transform_5, window_bounds = array<i64: 1, 8, 8, 128>}]} {
    %c0 = arith.constant 0 : index
    %c0_0 = arith.constant 0 : index
    %0 = vector.load %arg6[%c0, %c0_0] : memref<1x128xf32, #tpu.memory_space<vmem>>, vector<1x128xf32>
    %cst = arith.constant 0.000000e+00 : f32
    %1 = vector.broadcast %cst : f32 to vector<8x128xf32>
    %c0_1 = arith.constant 0 : index
    %c0_2 = arith.constant 0 : index
    %c0_3 = arith.constant 0 : index
    %c0_4 = arith.constant 0 : index
    %2 = vector.load %arg2[%c0_1, %c0_2, %c0_3, %c0_4] : memref<1x16x9x8xbf16, #tpu.memory_space<vmem>>, vector<1x1x8x8xbf16>
    %3 = vector.shape_cast %2 : vector<1x1x8x8xbf16> to vector<8x8xbf16>
    %c0_5 = arith.constant 0 : index
    %c0_6 = arith.constant 0 : index
    %c1 = arith.constant 1 : index
    %c0_7 = arith.constant 0 : index
    %4 = vector.load %arg2[%c0_5, %c0_6, %c1, %c0_7] : memref<1x16x9x8xbf16, #tpu.memory_space<vmem>>, vector<1x1x8x4xbf16>
    %5 = vector.shape_cast %4 : vector<1x1x8x4xbf16> to vector<8x4xbf16>
    %c0_8 = arith.constant 0 : index
    %c0_9 = arith.constant 0 : index
    %c0_10 = arith.constant 0 : index
    %6 = vector.load %arg4[%c0_8, %c0_9, %c0_10] : memref<3x8x128xbf16, #tpu.memory_space<vmem>>, vector<1x8x128xbf16>
    %7 = vector.shape_cast %6 : vector<1x8x128xbf16> to vector<8x128xbf16>
    %cst_11 = arith.constant dense<0.000000e+00> : vector<8x128xf32>
    %8 = tpu.matmul %3, %7, %cst_11 {dimension_numbers = #tpu.dot_dimension_numbers<[1], [0], [0], [1], [0, 0, 1, 1], [], []>} : vector<8x8xbf16>, vector<8x128xbf16>, vector<8x128xf32> -> vector<8x128xf32>
    %9 = arith.addf %1, %8 : vector<8x128xf32>
    %c0_12 = arith.constant 0 : index
    %c0_13 = arith.constant 0 : index
    %c0_14 = arith.constant 0 : index
    %10 = vector.load %arg5[%c0_12, %c0_13, %c0_14] : memref<3x4x128xbf16, #tpu.memory_space<vmem>>, vector<1x4x128xbf16>
    %11 = vector.shape_cast %10 : vector<1x4x128xbf16> to vector<4x128xbf16>
    %cst_15 = arith.constant dense<0.000000e+00> : vector<8x128xf32>
    %12 = tpu.matmul %5, %11, %cst_15 {dimension_numbers = #tpu.dot_dimension_numbers<[1], [0], [0], [1], [0, 0, 1, 1], [], []>} : vector<8x4xbf16>, vector<4x128xbf16>, vector<8x128xf32> -> vector<8x128xf32>
    %13 = arith.addf %9, %12 : vector<8x128xf32>
    %c0_16 = arith.constant 0 : index
    %c1_17 = arith.constant 1 : index
    %c0_18 = arith.constant 0 : index
    %c0_19 = arith.constant 0 : index
    %14 = vector.load %arg2[%c0_16, %c1_17, %c0_18, %c0_19] : memref<1x16x9x8xbf16, #tpu.memory_space<vmem>>, vector<1x1x8x8xbf16>
    %15 = vector.shape_cast %14 : vector<1x1x8x8xbf16> to vector<8x8xbf16>
    %c0_20 = arith.constant 0 : index
    %c1_21 = arith.constant 1 : index
    %c1_22 = arith.constant 1 : index
    %c0_23 = arith.constant 0 : index
    %16 = vector.load %arg2[%c0_20, %c1_21, %c1_22, %c0_23] : memref<1x16x9x8xbf16, #tpu.memory_space<vmem>>, vector<1x1x8x4xbf16>
    %17 = vector.shape_cast %16 : vector<1x1x8x4xbf16> to vector<8x4xbf16>
    %c1_24 = arith.constant 1 : index
    %c0_25 = arith.constant 0 : index
    %c0_26 = arith.constant 0 : index
    %18 = vector.load %arg4[%c1_24, %c0_25, %c0_26] : memref<3x8x128xbf16, #tpu.memory_space<vmem>>, vector<1x8x128xbf16>
    %19 = vector.shape_cast %18 : vector<1x8x128xbf16> to vector<8x128xbf16>
    %cst_27 = arith.constant dense<0.000000e+00> : vector<8x128xf32>
    %20 = tpu.matmul %15, %19, %cst_27 {dimension_numbers = #tpu.dot_dimension_numbers<[1], [0], [0], [1], [0, 0, 1, 1], [], []>} : vector<8x8xbf16>, vector<8x128xbf16>, vector<8x128xf32> -> vector<8x128xf32>
    %21 = arith.addf %13, %20 : vector<8x128xf32>
    %c1_28 = arith.constant 1 : index
    %c0_29 = arith.constant 0 : index
    %c0_30 = arith.constant 0 : index
    %22 = vector.load %arg5[%c1_28, %c0_29, %c0_30] : memref<3x4x128xbf16, #tpu.memory_space<vmem>>, vector<1x4x128xbf16>
    %23 = vector.shape_cast %22 : vector<1x4x128xbf16> to vector<4x128xbf16>
    %cst_31 = arith.constant dense<0.000000e+00> : vector<8x128xf32>
    %24 = tpu.matmul %17, %23, %cst_31 {dimension_numbers = #tpu.dot_dimension_numbers<[1], [0], [0], [1], [0, 0, 1, 1], [], []>} : vector<8x4xbf16>, vector<4x128xbf16>, vector<8x128xf32> -> vector<8x128xf32>
    %25 = arith.addf %21, %24 : vector<8x128xf32>
    %c0_32 = arith.constant 0 : index
    %c2 = arith.constant 2 : index
    %c0_33 = arith.constant 0 : index
    %c0_34 = arith.constant 0 : index
    %26 = vector.load %arg2[%c0_32, %c2, %c0_33, %c0_34] : memref<1x16x9x8xbf16, #tpu.memory_space<vmem>>, vector<1x1x8x8xbf16>
    %27 = vector.shape_cast %26 : vector<1x1x8x8xbf16> to vector<8x8xbf16>
    %c0_35 = arith.constant 0 : index
    %c2_36 = arith.constant 2 : index
    %c1_37 = arith.constant 1 : index
    %c0_38 = arith.constant 0 : index
    %28 = vector.load %arg2[%c0_35, %c2_36, %c1_37, %c0_38] : memref<1x16x9x8xbf16, #tpu.memory_space<vmem>>, vector<1x1x8x4xbf16>
    %29 = vector.shape_cast %28 : vector<1x1x8x4xbf16> to vector<8x4xbf16>
    %c2_39 = arith.constant 2 : index
    %c0_40 = arith.constant 0 : index
    %c0_41 = arith.constant 0 : index
    %30 = vector.load %arg4[%c2_39, %c0_40, %c0_41] : memref<3x8x128xbf16, #tpu.memory_space<vmem>>, vector<1x8x128xbf16>
    %31 = vector.shape_cast %30 : vector<1x8x128xbf16> to vector<8x128xbf16>
    %cst_42 = arith.constant dense<0.000000e+00> : vector<8x128xf32>
    %32 = tpu.matmul %27, %31, %cst_42 {dimension_numbers = #tpu.dot_dimension_numbers<[1], [0], [0], [1], [0, 0, 1, 1], [], []>} : vector<8x8xbf16>, vector<8x128xbf16>, vector<8x128xf32> -> vector<8x128xf32>
    %33 = arith.addf %25, %32 : vector<8x128xf32>
    %c2_43 = arith.constant 2 : index
    %c0_44 = arith.constant 0 : index
    %c0_45 = arith.constant 0 : index
    %34 = vector.load %arg5[%c2_43, %c0_44, %c0_45] : memref<3x4x128xbf16, #tpu.memory_space<vmem>>, vector<1x4x128xbf16>
    %35 = vector.shape_cast %34 : vector<1x4x128xbf16> to vector<4x128xbf16>
    %cst_46 = arith.constant dense<0.000000e+00> : vector<8x128xf32>
    %36 = tpu.matmul %29, %35, %cst_46 {dimension_numbers = #tpu.dot_dimension_numbers<[1], [0], [0], [1], [0, 0, 1, 1], [], []>} : vector<8x4xbf16>, vector<4x128xbf16>, vector<8x128xf32> -> vector<8x128xf32>
    %37 = arith.addf %33, %36 : vector<8x128xf32>
    %38 = vector.broadcast %0 : vector<1x128xf32> to vector<8x128xf32>
    %39 = arith.addf %37, %38 : vector<8x128xf32>
    %cst_47 = arith.constant 1.000000e-01 : f32
    %40 = vector.broadcast %cst_47 : f32 to vector<8x128xf32>
    %41 = arith.mulf %40, %39 : vector<8x128xf32>
    %42 = arith.maximumf %39, %41 : vector<8x128xf32>
    %43 = arith.truncf %42 : vector<8x128xf32> to vector<8x128xbf16>
    %c0_48 = arith.constant 0 : index
    %c0_49 = arith.constant 0 : index
    %c0_50 = arith.constant 0 : index
    %c0_51 = arith.constant 0 : index
    %44 = vector.load %arg7[%c0_48, %c0_49, %c0_50, %c0_51] : memref<1x8x8x128xbf16, #tpu.memory_space<vmem>>, vector<1x1x8x128xbf16>
    %45 = vector.shape_cast %44 : vector<1x1x8x128xbf16> to vector<8x128xbf16>
    %46 = vector.shape_cast %43 : vector<8x128xbf16> to vector<1x1x8x128xbf16>
    tpu.vector_store %arg7[%c0_48, %c0_49, %c0_50, %c0_51], %46 {strides = array<i32>} : memref<1x8x8x128xbf16, #tpu.memory_space<vmem>>, vector<1x1x8x128xbf16>,
    %cst_52 = arith.constant 0.000000e+00 : f32
    %47 = vector.broadcast %cst_52 : f32 to vector<8x128xf32>
    %c0_53 = arith.constant 0 : index
    %c2_54 = arith.constant 2 : index
    %c0_55 = arith.constant 0 : index
    %c0_56 = arith.constant 0 : index
    %48 = vector.load %arg2[%c0_53, %c2_54, %c0_55, %c0_56] : memref<1x16x9x8xbf16, #tpu.memory_space<vmem>>, vector<1x1x8x8xbf16>
    %49 = vector.shape_cast %48 : vector<1x1x8x8xbf16> to vector<8x8xbf16>
    %c0_57 = arith.constant 0 : index
    %c2_58 = arith.constant 2 : index
    %c1_59 = arith.constant 1 : index
    %c0_60 = arith.constant 0 : index
    %50 = vector.load %arg2[%c0_57, %c2_58, %c1_59, %c0_60] : memref<1x16x9x8xbf16, #tpu.memory_space<vmem>>, vector<1x1x8x4xbf16>
    %51 = vector.shape_cast %50 : vector<1x1x8x4xbf16> to vector<8x4xbf16>
    %c0_61 = arith.constant 0 : index
    %c0_62 = arith.constant 0 : index
    %c0_63 = arith.constant 0 : index
    %52 = vector.load %arg4[%c0_61, %c0_62, %c0_63] : memref<3x8x128xbf16, #tpu.memory_space<vmem>>, vector<1x8x128xbf16>
    %53 = vector.shape_cast %52 : vector<1x8x128xbf16> to vector<8x128xbf16>
    %cst_64 = arith.constant dense<0.000000e+00> : vector<8x128xf32>
    %54 = tpu.matmul %49, %53, %cst_64 {dimension_numbers = #tpu.dot_dimension_numbers<[1], [0], [0], [1], [0, 0, 1, 1], [], []>} : vector<8x8xbf16>, vector<8x128xbf16>, vector<8x128xf32> -> vector<8x128xf32>
    %55 = arith.addf %47, %54 : vector<8x128xf32>
    %c0_65 = arith.constant 0 : index
    %c0_66 = arith.constant 0 : index
    %c0_67 = arith.constant 0 : index
    %56 = vector.load %arg5[%c0_65, %c0_66, %c0_67] : memref<3x4x128xbf16, #tpu.memory_space<vmem>>, vector<1x4x128xbf16>
    %57 = vector.shape_cast %56 : vector<1x4x128xbf16> to vector<4x128xbf16>
    %cst_68 = arith.constant dense<0.000000e+00> : vector<8x128xf32>
    %58 = tpu.matmul %51, %57, %cst_68 {dimension_numbers = #tpu.dot_dimension_numbers<[1], [0], [0], [1], [0, 0, 1, 1], [], []>} : vector<8x4xbf16>, vector<4x128xbf16>, vector<8x128xf32> -> vector<8x128xf32>
    %59 = arith.addf %55, %58 : vector<8x128xf32>
    %c0_69 = arith.constant 0 : index
    %c3 = arith.constant 3 : index
    %c0_70 = arith.constant 0 : index
    %c0_71 = arith.constant 0 : index
    %60 = vector.load %arg2[%c0_69, %c3, %c0_70, %c0_71] : memref<1x16x9x8xbf16, #tpu.memory_space<vmem>>, vector<1x1x8x8xbf16>
    %61 = vector.shape_cast %60 : vector<1x1x8x8xbf16> to vector<8x8xbf16>
    %c0_72 = arith.constant 0 : index
    %c3_73 = arith.constant 3 : index
    %c1_74 = arith.constant 1 : index
    %c0_75 = arith.constant 0 : index
    %62 = vector.load %arg2[%c0_72, %c3_73, %c1_74, %c0_75] : memref<1x16x9x8xbf16, #tpu.memory_space<vmem>>, vector<1x1x8x4xbf16>
    %63 = vector.shape_cast %62 : vector<1x1x8x4xbf16> to vector<8x4xbf16>
    %c1_76 = arith.constant 1 : index
    %c0_77 = arith.constant 0 : index
    %c0_78 = arith.constant 0 : index
    %64 = vector.load %arg4[%c1_76, %c0_77, %c0_78] : memref<3x8x128xbf16, #tpu.memory_space<vmem>>, vector<1x8x128xbf16>
    %65 = vector.shape_cast %64 : vector<1x8x128xbf16> to vector<8x128xbf16>
    %cst_79 = arith.constant dense<0.000000e+00> : vector<8x128xf32>
    %66 = tpu.matmul %61, %65, %cst_79 {dimension_numbers = #tpu.dot_dimension_numbers<[1], [0], [0], [1], [0, 0, 1, 1], [], []>} : vector<8x8xbf16>, vector<8x128xbf16>, vector<8x128xf32> -> vector<8x128xf32>
    %67 = arith.addf %59, %66 : vector<8x128xf32>
    %c1_80 = arith.constant 1 : index
    %c0_81 = arith.constant 0 : index
    %c0_82 = arith.constant 0 : index
    %68 = vector.load %arg5[%c1_80, %c0_81, %c0_82] : memref<3x4x128xbf16, #tpu.memory_space<vmem>>, vector<1x4x128xbf16>
    %69 = vector.shape_cast %68 : vector<1x4x128xbf16> to vector<4x128xbf16>
    %cst_83 = arith.constant dense<0.000000e+00> : vector<8x128xf32>
    %70 = tpu.matmul %63, %69, %cst_83 {dimension_numbers = #tpu.dot_dimension_numbers<[1], [0], [0], [1], [0, 0, 1, 1], [], []>} : vector<8x4xbf16>, vector<4x128xbf16>, vector<8x128xf32> -> vector<8x128xf32>
    %71 = arith.addf %67, %70 : vector<8x128xf32>
    %c0_84 = arith.constant 0 : index
    %c4 = arith.constant 4 : index
    %c0_85 = arith.constant 0 : index
    %c0_86 = arith.constant 0 : index
    %72 = vector.load %arg2[%c0_84, %c4, %c0_85, %c0_86] : memref<1x16x9x8xbf16, #tpu.memory_space<vmem>>, vector<1x1x8x8xbf16>
    %73 = vector.shape_cast %72 : vector<1x1x8x8xbf16> to vector<8x8xbf16>
    %c0_87 = arith.constant 0 : index
    %c4_88 = arith.constant 4 : index
    %c1_89 = arith.constant 1 : index
    %c0_90 = arith.constant 0 : index
    %74 = vector.load %arg2[%c0_87, %c4_88, %c1_89, %c0_90] : memref<1x16x9x8xbf16, #tpu.memory_space<vmem>>, vector<1x1x8x4xbf16>
    %75 = vector.shape_cast %74 : vector<1x1x8x4xbf16> to vector<8x4xbf16>
    %c2_91 = arith.constant 2 : index
    %c0_92 = arith.constant 0 : index
    %c0_93 = arith.constant 0 : index
    %76 = vector.load %arg4[%c2_91, %c0_92, %c0_93] : memref<3x8x128xbf16, #tpu.memory_space<vmem>>, vector<1x8x128xbf16>
    %77 = vector.shape_cast %76 : vector<1x8x128xbf16> to vector<8x128xbf16>
    %cst_94 = arith.constant dense<0.000000e+00> : vector<8x128xf32>
    %78 = tpu.matmul %73, %77, %cst_94 {dimension_numbers = #tpu.dot_dimension_numbers<[1], [0], [0], [1], [0, 0, 1, 1], [], []>} : vector<8x8xbf16>, vector<8x128xbf16>, vector<8x128xf32> -> vector<8x128xf32>
    %79 = arith.addf %71, %78 : vector<8x128xf32>
    %c2_95 = arith.constant 2 : index
    %c0_96 = arith.constant 0 : index
    %c0_97 = arith.constant 0 : index
    %80 = vector.load %arg5[%c2_95, %c0_96, %c0_97] : memref<3x4x128xbf16, #tpu.memory_space<vmem>>, vector<1x4x128xbf16>
    %81 = vector.shape_cast %80 : vector<1x4x128xbf16> to vector<4x128xbf16>
    %cst_98 = arith.constant dense<0.000000e+00> : vector<8x128xf32>
    %82 = tpu.matmul %75, %81, %cst_98 {dimension_numbers = #tpu.dot_dimension_numbers<[1], [0], [0], [1], [0, 0, 1, 1], [], []>} : vector<8x4xbf16>, vector<4x128xbf16>, vector<8x128xf32> -> vector<8x128xf32>
    %83 = arith.addf %79, %82 : vector<8x128xf32>
    %84 = vector.broadcast %0 : vector<1x128xf32> to vector<8x128xf32>
    %85 = arith.addf %83, %84 : vector<8x128xf32>
    %cst_99 = arith.constant 1.000000e-01 : f32
    %86 = vector.broadcast %cst_99 : f32 to vector<8x128xf32>
    %87 = arith.mulf %86, %85 : vector<8x128xf32>
    %88 = arith.maximumf %85, %87 : vector<8x128xf32>
    %89 = arith.truncf %88 : vector<8x128xf32> to vector<8x128xbf16>
    %c0_100 = arith.constant 0 : index
    %c1_101 = arith.constant 1 : index
    %c0_102 = arith.constant 0 : index
    %c0_103 = arith.constant 0 : index
    %90 = vector.load %arg7[%c0_100, %c1_101, %c0_102, %c0_103] : memref<1x8x8x128xbf16, #tpu.memory_space<vmem>>, vector<1x1x8x128xbf16>
    %91 = vector.shape_cast %90 : vector<1x1x8x128xbf16> to vector<8x128xbf16>
    %92 = vector.shape_cast %89 : vector<8x128xbf16> to vector<1x1x8x128xbf16>
    tpu.vector_store %arg7[%c0_100, %c1_101, %c0_102, %c0_103], %92 {strides = array<i32>} : memref<1x8x8x128xbf16, #tpu.memory_space<vmem>>, vector<1x1x8x128xbf16>,
    %cst_104 = arith.constant 0.000000e+00 : f32
    %93 = vector.broadcast %cst_104 : f32 to vector<8x128xf32>
    %c0_105 = arith.constant 0 : index
    %c4_106 = arith.constant 4 : index
    %c0_107 = arith.constant 0 : index
    %c0_108 = arith.constant 0 : index
    %94 = vector.load %arg2[%c0_105, %c4_106, %c0_107, %c0_108] : memref<1x16x9x8xbf16, #tpu.memory_space<vmem>>, vector<1x1x8x8xbf16>
    %95 = vector.shape_cast %94 : vector<1x1x8x8xbf16> to vector<8x8xbf16>
    %c0_109 = arith.constant 0 : index
    %c4_110 = arith.constant 4 : index
    %c1_111 = arith.constant 1 : index
    %c0_112 = arith.constant 0 : index
    %96 = vector.load %arg2[%c0_109, %c4_110, %c1_111, %c0_112] : memref<1x16x9x8xbf16, #tpu.memory_space<vmem>>, vector<1x1x8x4xbf16>
    %97 = vector.shape_cast %96 : vector<1x1x8x4xbf16> to vector<8x4xbf16>
    %c0_113 = arith.constant 0 : index
    %c0_114 = arith.constant 0 : index
    %c0_115 = arith.constant 0 : index
    %98 = vector.load %arg4[%c0_113, %c0_114, %c0_115] : memref<3x8x128xbf16, #tpu.memory_space<vmem>>, vector<1x8x128xbf16>
    %99 = vector.shape_cast %98 : vector<1x8x128xbf16> to vector<8x128xbf16>
    %cst_116 = arith.constant dense<0.000000e+00> : vector<8x128xf32>
    %100 = tpu.matmul %95, %99, %cst_116 {dimension_numbers = #tpu.dot_dimension_numbers<[1], [0], [0], [1], [0, 0, 1, 1], [], []>} : vector<8x8xbf16>, vector<8x128xbf16>, vector<8x128xf32> -> vector<8x128xf32>
    %101 = arith.addf %93, %100 : vector<8x128xf32>
    %c0_117 = arith.constant 0 : index
    %c0_118 = arith.constant 0 : index
    %c0_119 = arith.constant 0 : index
    %102 = vector.load %arg5[%c0_117, %c0_118, %c0_119] : memref<3x4x128xbf16, #tpu.memory_space<vmem>>, vector<1x4x128xbf16>
    %103 = vector.shape_cast %102 : vector<1x4x128xbf16> to vector<4x128xbf16>
    %cst_120 = arith.constant dense<0.000000e+00> : vector<8x128xf32>
    %104 = tpu.matmul %97, %103, %cst_120 {dimension_numbers = #tpu.dot_dimension_numbers<[1], [0], [0], [1], [0, 0, 1, 1], [], []>} : vector<8x4xbf16>, vector<4x128xbf16>, vector<8x128xf32> -> vector<8x128xf32>
    %105 = arith.addf %101, %104 : vector<8x128xf32>
    %c0_121 = arith.constant 0 : index
    %c5 = arith.constant 5 : index
    %c0_122 = arith.constant 0 : index
    %c0_123 = arith.constant 0 : index
    %106 = vector.load %arg2[%c0_121, %c5, %c0_122, %c0_123] : memref<1x16x9x8xbf16, #tpu.memory_space<vmem>>, vector<1x1x8x8xbf16>
    %107 = vector.shape_cast %106 : vector<1x1x8x8xbf16> to vector<8x8xbf16>
    %c0_124 = arith.constant 0 : index
    %c5_125 = arith.constant 5 : index
    %c1_126 = arith.constant 1 : index
    %c0_127 = arith.constant 0 : index
    %108 = vector.load %arg2[%c0_124, %c5_125, %c1_126, %c0_127] : memref<1x16x9x8xbf16, #tpu.memory_space<vmem>>, vector<1x1x8x4xbf16>
    %109 = vector.shape_cast %108 : vector<1x1x8x4xbf16> to vector<8x4xbf16>
    %c1_128 = arith.constant 1 : index
    %c0_129 = arith.constant 0 : index
    %c0_130 = arith.constant 0 : index
    %110 = vector.load %arg4[%c1_128, %c0_129, %c0_130] : memref<3x8x128xbf16, #tpu.memory_space<vmem>>, vector<1x8x128xbf16>
    %111 = vector.shape_cast %110 : vector<1x8x128xbf16> to vector<8x128xbf16>
    %cst_131 = arith.constant dense<0.000000e+00> : vector<8x128xf32>
    %112 = tpu.matmul %107, %111, %cst_131 {dimension_numbers = #tpu.dot_dimension_numbers<[1], [0], [0], [1], [0, 0, 1, 1], [], []>} : vector<8x8xbf16>, vector<8x128xbf16>, vector<8x128xf32> -> vector<8x128xf32>
    %113 = arith.addf %105, %112 : vector<8x128xf32>
    %c1_132 = arith.constant 1 : index
    %c0_133 = arith.constant 0 : index
    %c0_134 = arith.constant 0 : index
    %114 = vector.load %arg5[%c1_132, %c0_133, %c0_134] : memref<3x4x128xbf16, #tpu.memory_space<vmem>>, vector<1x4x128xbf16>
    %115 = vector.shape_cast %114 : vector<1x4x128xbf16> to vector<4x128xbf16>
    %cst_135 = arith.constant dense<0.000000e+00> : vector<8x128xf32>
    %116 = tpu.matmul %109, %115, %cst_135 {dimension_numbers = #tpu.dot_dimension_numbers<[1], [0], [0], [1], [0, 0, 1, 1], [], []>} : vector<8x4xbf16>, vector<4x128xbf16>, vector<8x128xf32> -> vector<8x128xf32>
    %117 = arith.addf %113, %116 : vector<8x128xf32>
    %c0_136 = arith.constant 0 : index
    %c6 = arith.constant 6 : index
    %c0_137 = arith.constant 0 : index
    %c0_138 = arith.constant 0 : index
    %118 = vector.load %arg2[%c0_136, %c6, %c0_137, %c0_138] : memref<1x16x9x8xbf16, #tpu.memory_space<vmem>>, vector<1x1x8x8xbf16>
    %119 = vector.shape_cast %118 : vector<1x1x8x8xbf16> to vector<8x8xbf16>
    %c0_139 = arith.constant 0 : index
    %c6_140 = arith.constant 6 : index
    %c1_141 = arith.constant 1 : index
    %c0_142 = arith.constant 0 : index
    %120 = vector.load %arg2[%c0_139, %c6_140, %c1_141, %c0_142] : memref<1x16x9x8xbf16, #tpu.memory_space<vmem>>, vector<1x1x8x4xbf16>
    %121 = vector.shape_cast %120 : vector<1x1x8x4xbf16> to vector<8x4xbf16>
    %c2_143 = arith.constant 2 : index
    %c0_144 = arith.constant 0 : index
    %c0_145 = arith.constant 0 : index
    %122 = vector.load %arg4[%c2_143, %c0_144, %c0_145] : memref<3x8x128xbf16, #tpu.memory_space<vmem>>, vector<1x8x128xbf16>
    %123 = vector.shape_cast %122 : vector<1x8x128xbf16> to vector<8x128xbf16>
    %cst_146 = arith.constant dense<0.000000e+00> : vector<8x128xf32>
    %124 = tpu.matmul %119, %123, %cst_146 {dimension_numbers = #tpu.dot_dimension_numbers<[1], [0], [0], [1], [0, 0, 1, 1], [], []>} : vector<8x8xbf16>, vector<8x128xbf16>, vector<8x128xf32> -> vector<8x128xf32>
    %125 = arith.addf %117, %124 : vector<8x128xf32>
    %c2_147 = arith.constant 2 : index
    %c0_148 = arith.constant 0 : index
    %c0_149 = arith.constant 0 : index
    %126 = vector.load %arg5[%c2_147, %c0_148, %c0_149] : memref<3x4x128xbf16, #tpu.memory_space<vmem>>, vector<1x4x128xbf16>
    %127 = vector.shape_cast %126 : vector<1x4x128xbf16> to vector<4x128xbf16>
    %cst_150 = arith.constant dense<0.000000e+00> : vector<8x128xf32>
    %128 = tpu.matmul %121, %127, %cst_150 {dimension_numbers = #tpu.dot_dimension_numbers<[1], [0], [0], [1], [0, 0, 1, 1], [], []>} : vector<8x4xbf16>, vector<4x128xbf16>, vector<8x128xf32> -> vector<8x128xf32>
    %129 = arith.addf %125, %128 : vector<8x128xf32>
    %130 = vector.broadcast %0 : vector<1x128xf32> to vector<8x128xf32>
    %131 = arith.addf %129, %130 : vector<8x128xf32>
    %cst_151 = arith.constant 1.000000e-01 : f32
    %132 = vector.broadcast %cst_151 : f32 to vector<8x128xf32>
    %133 = arith.mulf %132, %131 : vector<8x128xf32>
    %134 = arith.maximumf %131, %133 : vector<8x128xf32>
    %135 = arith.truncf %134 : vector<8x128xf32> to vector<8x128xbf16>
    %c0_152 = arith.constant 0 : index
    %c2_153 = arith.constant 2 : index
    %c0_154 = arith.constant 0 : index
    %c0_155 = arith.constant 0 : index
    %136 = vector.load %arg7[%c0_152, %c2_153, %c0_154, %c0_155] : memref<1x8x8x128xbf16, #tpu.memory_space<vmem>>, vector<1x1x8x128xbf16>
    %137 = vector.shape_cast %136 : vector<1x1x8x128xbf16> to vector<8x128xbf16>
    %138 = vector.shape_cast %135 : vector<8x128xbf16> to vector<1x1x8x128xbf16>
    tpu.vector_store %arg7[%c0_152, %c2_153, %c0_154, %c0_155], %138 {strides = array<i32>} : memref<1x8x8x128xbf16, #tpu.memory_space<vmem>>, vector<1x1x8x128xbf16>,
    %cst_156 = arith.constant 0.000000e+00 : f32
    %139 = vector.broadcast %cst_156 : f32 to vector<8x128xf32>
    %c0_157 = arith.constant 0 : index
    %c6_158 = arith.constant 6 : index
    %c0_159 = arith.constant 0 : index
    %c0_160 = arith.constant 0 : index
    %140 = vector.load %arg2[%c0_157, %c6_158, %c0_159, %c0_160] : memref<1x16x9x8xbf16, #tpu.memory_space<vmem>>, vector<1x1x8x8xbf16>
    %141 = vector.shape_cast %140 : vector<1x1x8x8xbf16> to vector<8x8xbf16>
    %c0_161 = arith.constant 0 : index
    %c6_162 = arith.constant 6 : index
    %c1_163 = arith.constant 1 : index
    %c0_164 = arith.constant 0 : index
    %142 = vector.load %arg2[%c0_161, %c6_162, %c1_163, %c0_164] : memref<1x16x9x8xbf16, #tpu.memory_space<vmem>>, vector<1x1x8x4xbf16>
    %143 = vector.shape_cast %142 : vector<1x1x8x4xbf16> to vector<8x4xbf16>
    %c0_165 = arith.constant 0 : index
    %c0_166 = arith.constant 0 : index
    %c0_167 = arith.constant 0 : index
    %144 = vector.load %arg4[%c0_165, %c0_166, %c0_167] : memref<3x8x128xbf16, #tpu.memory_space<vmem>>, vector<1x8x128xbf16>
    %145 = vector.shape_cast %144 : vector<1x8x128xbf16> to vector<8x128xbf16>
    %cst_168 = arith.constant dense<0.000000e+00> : vector<8x128xf32>
    %146 = tpu.matmul %141, %145, %cst_168 {dimension_numbers = #tpu.dot_dimension_numbers<[1], [0], [0], [1], [0, 0, 1, 1], [], []>} : vector<8x8xbf16>, vector<8x128xbf16>, vector<8x128xf32> -> vector<8x128xf32>
    %147 = arith.addf %139, %146 : vector<8x128xf32>
    %c0_169 = arith.constant 0 : index
    %c0_170 = arith.constant 0 : index
    %c0_171 = arith.constant 0 : index
    %148 = vector.load %arg5[%c0_169, %c0_170, %c0_171] : memref<3x4x128xbf16, #tpu.memory_space<vmem>>, vector<1x4x128xbf16>
    %149 = vector.shape_cast %148 : vector<1x4x128xbf16> to vector<4x128xbf16>
    %cst_172 = arith.constant dense<0.000000e+00> : vector<8x128xf32>
    %150 = tpu.matmul %143, %149, %cst_172 {dimension_numbers = #tpu.dot_dimension_numbers<[1], [0], [0], [1], [0, 0, 1, 1], [], []>} : vector<8x4xbf16>, vector<4x128xbf16>, vector<8x128xf32> -> vector<8x128xf32>
    %151 = arith.addf %147, %150 : vector<8x128xf32>
    %c0_173 = arith.constant 0 : index
    %c7 = arith.constant 7 : index
    %c0_174 = arith.constant 0 : index
    %c0_175 = arith.constant 0 : index
    %152 = vector.load %arg2[%c0_173, %c7, %c0_174, %c0_175] : memref<1x16x9x8xbf16, #tpu.memory_space<vmem>>, vector<1x1x8x8xbf16>
    %153 = vector.shape_cast %152 : vector<1x1x8x8xbf16> to vector<8x8xbf16>
    %c0_176 = arith.constant 0 : index
    %c7_177 = arith.constant 7 : index
    %c1_178 = arith.constant 1 : index
    %c0_179 = arith.constant 0 : index
    %154 = vector.load %arg2[%c0_176, %c7_177, %c1_178, %c0_179] : memref<1x16x9x8xbf16, #tpu.memory_space<vmem>>, vector<1x1x8x4xbf16>
    %155 = vector.shape_cast %154 : vector<1x1x8x4xbf16> to vector<8x4xbf16>
    %c1_180 = arith.constant 1 : index
    %c0_181 = arith.constant 0 : index
    %c0_182 = arith.constant 0 : index
    %156 = vector.load %arg4[%c1_180, %c0_181, %c0_182] : memref<3x8x128xbf16, #tpu.memory_space<vmem>>, vector<1x8x128xbf16>
    %157 = vector.shape_cast %156 : vector<1x8x128xbf16> to vector<8x128xbf16>
    %cst_183 = arith.constant dense<0.000000e+00> : vector<8x128xf32>
    %158 = tpu.matmul %153, %157, %cst_183 {dimension_numbers = #tpu.dot_dimension_numbers<[1], [0], [0], [1], [0, 0, 1, 1], [], []>} : vector<8x8xbf16>, vector<8x128xbf16>, vector<8x128xf32> -> vector<8x128xf32>
    %159 = arith.addf %151, %158 : vector<8x128xf32>
    %c1_184 = arith.constant 1 : index
    %c0_185 = arith.constant 0 : index
    %c0_186 = arith.constant 0 : index
    %160 = vector.load %arg5[%c1_184, %c0_185, %c0_186] : memref<3x4x128xbf16, #tpu.memory_space<vmem>>, vector<1x4x128xbf16>
    %161 = vector.shape_cast %160 : vector<1x4x128xbf16> to vector<4x128xbf16>
    %cst_187 = arith.constant dense<0.000000e+00> : vector<8x128xf32>
    %162 = tpu.matmul %155, %161, %cst_187 {dimension_numbers = #tpu.dot_dimension_numbers<[1], [0], [0], [1], [0, 0, 1, 1], [], []>} : vector<8x4xbf16>, vector<4x128xbf16>, vector<8x128xf32> -> vector<8x128xf32>
    %163 = arith.addf %159, %162 : vector<8x128xf32>
    %c0_188 = arith.constant 0 : index
    %c8 = arith.constant 8 : index
    %c0_189 = arith.constant 0 : index
    %c0_190 = arith.constant 0 : index
    %164 = vector.load %arg2[%c0_188, %c8, %c0_189, %c0_190] : memref<1x16x9x8xbf16, #tpu.memory_space<vmem>>, vector<1x1x8x8xbf16>
    %165 = vector.shape_cast %164 : vector<1x1x8x8xbf16> to vector<8x8xbf16>
    %c0_191 = arith.constant 0 : index
    %c8_192 = arith.constant 8 : index
    %c1_193 = arith.constant 1 : index
    %c0_194 = arith.constant 0 : index
    %166 = vector.load %arg2[%c0_191, %c8_192, %c1_193, %c0_194] : memref<1x16x9x8xbf16, #tpu.memory_space<vmem>>, vector<1x1x8x4xbf16>
    %167 = vector.shape_cast %166 : vector<1x1x8x4xbf16> to vector<8x4xbf16>
    %c2_195 = arith.constant 2 : index
    %c0_196 = arith.constant 0 : index
    %c0_197 = arith.constant 0 : index
    %168 = vector.load %arg4[%c2_195, %c0_196, %c0_197] : memref<3x8x128xbf16, #tpu.memory_space<vmem>>, vector<1x8x128xbf16>
    %169 = vector.shape_cast %168 : vector<1x8x128xbf16> to vector<8x128xbf16>
    %cst_198 = arith.constant dense<0.000000e+00> : vector<8x128xf32>
    %170 = tpu.matmul %165, %169, %cst_198 {dimension_numbers = #tpu.dot_dimension_numbers<[1], [0], [0], [1], [0, 0, 1, 1], [], []>} : vector<8x8xbf16>, vector<8x128xbf16>, vector<8x128xf32> -> vector<8x128xf32>
    %171 = arith.addf %163, %170 : vector<8x128xf32>
    %c2_199 = arith.constant 2 : index
    %c0_200 = arith.constant 0 : index
    %c0_201 = arith.constant 0 : index
    %172 = vector.load %arg5[%c2_199, %c0_200, %c0_201] : memref<3x4x128xbf16, #tpu.memory_space<vmem>>, vector<1x4x128xbf16>
    %173 = vector.shape_cast %172 : vector<1x4x128xbf16> to vector<4x128xbf16>
    %cst_202 = arith.constant dense<0.000000e+00> : vector<8x128xf32>
    %174 = tpu.matmul %167, %173, %cst_202 {dimension_numbers = #tpu.dot_dimension_numbers<[1], [0], [0], [1], [0, 0, 1, 1], [], []>} : vector<8x4xbf16>, vector<4x128xbf16>, vector<8x128xf32> -> vector<8x128xf32>
    %175 = arith.addf %171, %174 : vector<8x128xf32>
    %176 = vector.broadcast %0 : vector<1x128xf32> to vector<8x128xf32>
    %177 = arith.addf %175, %176 : vector<8x128xf32>
    %cst_203 = arith.constant 1.000000e-01 : f32
    %178 = vector.broadcast %cst_203 : f32 to vector<8x128xf32>
    %179 = arith.mulf %178, %177 : vector<8x128xf32>
    %180 = arith.maximumf %177, %179 : vector<8x128xf32>
    %181 = arith.truncf %180 : vector<8x128xf32> to vector<8x128xbf16>
    %c0_204 = arith.constant 0 : index
    %c3_205 = arith.constant 3 : index
    %c0_206 = arith.constant 0 : index
    %c0_207 = arith.constant 0 : index
    %182 = vector.load %arg7[%c0_204, %c3_205, %c0_206, %c0_207] : memref<1x8x8x128xbf16, #tpu.memory_space<vmem>>, vector<1x1x8x128xbf16>
    %183 = vector.shape_cast %182 : vector<1x1x8x128xbf16> to vector<8x128xbf16>
    %184 = vector.shape_cast %181 : vector<8x128xbf16> to vector<1x1x8x128xbf16>
    tpu.vector_store %arg7[%c0_204, %c3_205, %c0_206, %c0_207], %184 {strides = array<i32>} : memref<1x8x8x128xbf16, #tpu.memory_space<vmem>>, vector<1x1x8x128xbf16>,
    %cst_208 = arith.constant 0.000000e+00 : f32
    %185 = vector.broadcast %cst_208 : f32 to vector<8x128xf32>
    %c0_209 = arith.constant 0 : index
    %c8_210 = arith.constant 8 : index
    %c0_211 = arith.constant 0 : index
    %c0_212 = arith.constant 0 : index
    %186 = vector.load %arg2[%c0_209, %c8_210, %c0_211, %c0_212] : memref<1x16x9x8xbf16, #tpu.memory_space<vmem>>, vector<1x1x8x8xbf16>
    %187 = vector.shape_cast %186 : vector<1x1x8x8xbf16> to vector<8x8xbf16>
    %c0_213 = arith.constant 0 : index
    %c8_214 = arith.constant 8 : index
    %c1_215 = arith.constant 1 : index
    %c0_216 = arith.constant 0 : index
    %188 = vector.load %arg2[%c0_213, %c8_214, %c1_215, %c0_216] : memref<1x16x9x8xbf16, #tpu.memory_space<vmem>>, vector<1x1x8x4xbf16>
    %189 = vector.shape_cast %188 : vector<1x1x8x4xbf16> to vector<8x4xbf16>
    %c0_217 = arith.constant 0 : index
    %c0_218 = arith.constant 0 : index
    %c0_219 = arith.constant 0 : index
    %190 = vector.load %arg4[%c0_217, %c0_218, %c0_219] : memref<3x8x128xbf16, #tpu.memory_space<vmem>>, vector<1x8x128xbf16>
    %191 = vector.shape_cast %190 : vector<1x8x128xbf16> to vector<8x128xbf16>
    %cst_220 = arith.constant dense<0.000000e+00> : vector<8x128xf32>
    %192 = tpu.matmul %187, %191, %cst_220 {dimension_numbers = #tpu.dot_dimension_numbers<[1], [0], [0], [1], [0, 0, 1, 1], [], []>} : vector<8x8xbf16>, vector<8x128xbf16>, vector<8x128xf32> -> vector<8x128xf32>
    %193 = arith.addf %185, %192 : vector<8x128xf32>
    %c0_221 = arith.constant 0 : index
    %c0_222 = arith.constant 0 : index
    %c0_223 = arith.constant 0 : index
    %194 = vector.load %arg5[%c0_221, %c0_222, %c0_223] : memref<3x4x128xbf16, #tpu.memory_space<vmem>>, vector<1x4x128xbf16>
    %195 = vector.shape_cast %194 : vector<1x4x128xbf16> to vector<4x128xbf16>
    %cst_224 = arith.constant dense<0.000000e+00> : vector<8x128xf32>
    %196 = tpu.matmul %189, %195, %cst_224 {dimension_numbers = #tpu.dot_dimension_numbers<[1], [0], [0], [1], [0, 0, 1, 1], [], []>} : vector<8x4xbf16>, vector<4x128xbf16>, vector<8x128xf32> -> vector<8x128xf32>
    %197 = arith.addf %193, %196 : vector<8x128xf32>
    %c0_225 = arith.constant 0 : index
    %c9 = arith.constant 9 : index
    %c0_226 = arith.constant 0 : index
    %c0_227 = arith.constant 0 : index
    %198 = vector.load %arg2[%c0_225, %c9, %c0_226, %c0_227] : memref<1x16x9x8xbf16, #tpu.memory_space<vmem>>, vector<1x1x8x8xbf16>
    %199 = vector.shape_cast %198 : vector<1x1x8x8xbf16> to vector<8x8xbf16>
    %c0_228 = arith.constant 0 : index
    %c9_229 = arith.constant 9 : index
    %c1_230 = arith.constant 1 : index
    %c0_231 = arith.constant 0 : index
    %200 = vector.load %arg2[%c0_228, %c9_229, %c1_230, %c0_231] : memref<1x16x9x8xbf16, #tpu.memory_space<vmem>>, vector<1x1x8x4xbf16>
    %201 = vector.shape_cast %200 : vector<1x1x8x4xbf16> to vector<8x4xbf16>
    %c1_232 = arith.constant 1 : index
    %c0_233 = arith.constant 0 : index
    %c0_234 = arith.constant 0 : index
    %202 = vector.load %arg4[%c1_232, %c0_233, %c0_234] : memref<3x8x128xbf16, #tpu.memory_space<vmem>>, vector<1x8x128xbf16>
    %203 = vector.shape_cast %202 : vector<1x8x128xbf16> to vector<8x128xbf16>
    %cst_235 = arith.constant dense<0.000000e+00> : vector<8x128xf32>
    %204 = tpu.matmul %199, %203, %cst_235 {dimension_numbers = #tpu.dot_dimension_numbers<[1], [0], [0], [1], [0, 0, 1, 1], [], []>} : vector<8x8xbf16>, vector<8x128xbf16>, vector<8x128xf32> -> vector<8x128xf32>
    %205 = arith.addf %197, %204 : vector<8x128xf32>
    %c1_236 = arith.constant 1 : index
    %c0_237 = arith.constant 0 : index
    %c0_238 = arith.constant 0 : index
    %206 = vector.load %arg5[%c1_236, %c0_237, %c0_238] : memref<3x4x128xbf16, #tpu.memory_space<vmem>>, vector<1x4x128xbf16>
    %207 = vector.shape_cast %206 : vector<1x4x128xbf16> to vector<4x128xbf16>
    %cst_239 = arith.constant dense<0.000000e+00> : vector<8x128xf32>
    %208 = tpu.matmul %201, %207, %cst_239 {dimension_numbers = #tpu.dot_dimension_numbers<[1], [0], [0], [1], [0, 0, 1, 1], [], []>} : vector<8x4xbf16>, vector<4x128xbf16>, vector<8x128xf32> -> vector<8x128xf32>
    %209 = arith.addf %205, %208 : vector<8x128xf32>
    %c0_240 = arith.constant 0 : index
    %c10 = arith.constant 10 : index
    %c0_241 = arith.constant 0 : index
    %c0_242 = arith.constant 0 : index
    %210 = vector.load %arg2[%c0_240, %c10, %c0_241, %c0_242] : memref<1x16x9x8xbf16, #tpu.memory_space<vmem>>, vector<1x1x8x8xbf16>
    %211 = vector.shape_cast %210 : vector<1x1x8x8xbf16> to vector<8x8xbf16>
    %c0_243 = arith.constant 0 : index
    %c10_244 = arith.constant 10 : index
    %c1_245 = arith.constant 1 : index
    %c0_246 = arith.constant 0 : index
    %212 = vector.load %arg2[%c0_243, %c10_244, %c1_245, %c0_246] : memref<1x16x9x8xbf16, #tpu.memory_space<vmem>>, vector<1x1x8x4xbf16>
    %213 = vector.shape_cast %212 : vector<1x1x8x4xbf16> to vector<8x4xbf16>
    %c2_247 = arith.constant 2 : index
    %c0_248 = arith.constant 0 : index
    %c0_249 = arith.constant 0 : index
    %214 = vector.load %arg4[%c2_247, %c0_248, %c0_249] : memref<3x8x128xbf16, #tpu.memory_space<vmem>>, vector<1x8x128xbf16>
    %215 = vector.shape_cast %214 : vector<1x8x128xbf16> to vector<8x128xbf16>
    %cst_250 = arith.constant dense<0.000000e+00> : vector<8x128xf32>
    %216 = tpu.matmul %211, %215, %cst_250 {dimension_numbers = #tpu.dot_dimension_numbers<[1], [0], [0], [1], [0, 0, 1, 1], [], []>} : vector<8x8xbf16>, vector<8x128xbf16>, vector<8x128xf32> -> vector<8x128xf32>
    %217 = arith.addf %209, %216 : vector<8x128xf32>
    %c2_251 = arith.constant 2 : index
    %c0_252 = arith.constant 0 : index
    %c0_253 = arith.constant 0 : index
    %218 = vector.load %arg5[%c2_251, %c0_252, %c0_253] : memref<3x4x128xbf16, #tpu.memory_space<vmem>>, vector<1x4x128xbf16>
    %219 = vector.shape_cast %218 : vector<1x4x128xbf16> to vector<4x128xbf16>
    %cst_254 = arith.constant dense<0.000000e+00> : vector<8x128xf32>
    %220 = tpu.matmul %213, %219, %cst_254 {dimension_numbers = #tpu.dot_dimension_numbers<[1], [0], [0], [1], [0, 0, 1, 1], [], []>} : vector<8x4xbf16>, vector<4x128xbf16>, vector<8x128xf32> -> vector<8x128xf32>
    %221 = arith.addf %217, %220 : vector<8x128xf32>
    %222 = vector.broadcast %0 : vector<1x128xf32> to vector<8x128xf32>
    %223 = arith.addf %221, %222 : vector<8x128xf32>
    %cst_255 = arith.constant 1.000000e-01 : f32
    %224 = vector.broadcast %cst_255 : f32 to vector<8x128xf32>
    %225 = arith.mulf %224, %223 : vector<8x128xf32>
    %226 = arith.maximumf %223, %225 : vector<8x128xf32>
    %227 = arith.truncf %226 : vector<8x128xf32> to vector<8x128xbf16>
    %c0_256 = arith.constant 0 : index
    %c4_257 = arith.constant 4 : index
    %c0_258 = arith.constant 0 : index
    %c0_259 = arith.constant 0 : index
    %228 = vector.load %arg7[%c0_256, %c4_257, %c0_258, %c0_259] : memref<1x8x8x128xbf16, #tpu.memory_space<vmem>>, vector<1x1x8x128xbf16>
    %229 = vector.shape_cast %228 : vector<1x1x8x128xbf16> to vector<8x128xbf16>
    %230 = vector.shape_cast %227 : vector<8x128xbf16> to vector<1x1x8x128xbf16>
    tpu.vector_store %arg7[%c0_256, %c4_257, %c0_258, %c0_259], %230 {strides = array<i32>} : memref<1x8x8x128xbf16, #tpu.memory_space<vmem>>, vector<1x1x8x128xbf16>,
    %cst_260 = arith.constant 0.000000e+00 : f32
    %231 = vector.broadcast %cst_260 : f32 to vector<8x128xf32>
    %c0_261 = arith.constant 0 : index
    %c10_262 = arith.constant 10 : index
    %c0_263 = arith.constant 0 : index
    %c0_264 = arith.constant 0 : index
    %232 = vector.load %arg2[%c0_261, %c10_262, %c0_263, %c0_264] : memref<1x16x9x8xbf16, #tpu.memory_space<vmem>>, vector<1x1x8x8xbf16>
    %233 = vector.shape_cast %232 : vector<1x1x8x8xbf16> to vector<8x8xbf16>
    %c0_265 = arith.constant 0 : index
    %c10_266 = arith.constant 10 : index
    %c1_267 = arith.constant 1 : index
    %c0_268 = arith.constant 0 : index
    %234 = vector.load %arg2[%c0_265, %c10_266, %c1_267, %c0_268] : memref<1x16x9x8xbf16, #tpu.memory_space<vmem>>, vector<1x1x8x4xbf16>
    %235 = vector.shape_cast %234 : vector<1x1x8x4xbf16> to vector<8x4xbf16>
    %c0_269 = arith.constant 0 : index
    %c0_270 = arith.constant 0 : index
    %c0_271 = arith.constant 0 : index
    %236 = vector.load %arg4[%c0_269, %c0_270, %c0_271] : memref<3x8x128xbf16, #tpu.memory_space<vmem>>, vector<1x8x128xbf16>
    %237 = vector.shape_cast %236 : vector<1x8x128xbf16> to vector<8x128xbf16>
    %cst_272 = arith.constant dense<0.000000e+00> : vector<8x128xf32>
    %238 = tpu.matmul %233, %237, %cst_272 {dimension_numbers = #tpu.dot_dimension_numbers<[1], [0], [0], [1], [0, 0, 1, 1], [], []>} : vector<8x8xbf16>, vector<8x128xbf16>, vector<8x128xf32> -> vector<8x128xf32>
    %239 = arith.addf %231, %238 : vector<8x128xf32>
    %c0_273 = arith.constant 0 : index
    %c0_274 = arith.constant 0 : index
    %c0_275 = arith.constant 0 : index
    %240 = vector.load %arg5[%c0_273, %c0_274, %c0_275] : memref<3x4x128xbf16, #tpu.memory_space<vmem>>, vector<1x4x128xbf16>
    %241 = vector.shape_cast %240 : vector<1x4x128xbf16> to vector<4x128xbf16>
    %cst_276 = arith.constant dense<0.000000e+00> : vector<8x128xf32>
    %242 = tpu.matmul %235, %241, %cst_276 {dimension_numbers = #tpu.dot_dimension_numbers<[1], [0], [0], [1], [0, 0, 1, 1], [], []>} : vector<8x4xbf16>, vector<4x128xbf16>, vector<8x128xf32> -> vector<8x128xf32>
    %243 = arith.addf %239, %242 : vector<8x128xf32>
    %c0_277 = arith.constant 0 : index
    %c11 = arith.constant 11 : index
    %c0_278 = arith.constant 0 : index
    %c0_279 = arith.constant 0 : index
    %244 = vector.load %arg2[%c0_277, %c11, %c0_278, %c0_279] : memref<1x16x9x8xbf16, #tpu.memory_space<vmem>>, vector<1x1x8x8xbf16>
    %245 = vector.shape_cast %244 : vector<1x1x8x8xbf16> to vector<8x8xbf16>
    %c0_280 = arith.constant 0 : index
    %c11_281 = arith.constant 11 : index
    %c1_282 = arith.constant 1 : index
    %c0_283 = arith.constant 0 : index
    %246 = vector.load %arg2[%c0_280, %c11_281, %c1_282, %c0_283] : memref<1x16x9x8xbf16, #tpu.memory_space<vmem>>, vector<1x1x8x4xbf16>
    %247 = vector.shape_cast %246 : vector<1x1x8x4xbf16> to vector<8x4xbf16>
    %c1_284 = arith.constant 1 : index
    %c0_285 = arith.constant 0 : index
    %c0_286 = arith.constant 0 : index
    %248 = vector.load %arg4[%c1_284, %c0_285, %c0_286] : memref<3x8x128xbf16, #tpu.memory_space<vmem>>, vector<1x8x128xbf16>
    %249 = vector.shape_cast %248 : vector<1x8x128xbf16> to vector<8x128xbf16>
    %cst_287 = arith.constant dense<0.000000e+00> : vector<8x128xf32>
    %250 = tpu.matmul %245, %249, %cst_287 {dimension_numbers = #tpu.dot_dimension_numbers<[1], [0], [0], [1], [0, 0, 1, 1], [], []>} : vector<8x8xbf16>, vector<8x128xbf16>, vector<8x128xf32> -> vector<8x128xf32>
    %251 = arith.addf %243, %250 : vector<8x128xf32>
    %c1_288 = arith.constant 1 : index
    %c0_289 = arith.constant 0 : index
    %c0_290 = arith.constant 0 : index
    %252 = vector.load %arg5[%c1_288, %c0_289, %c0_290] : memref<3x4x128xbf16, #tpu.memory_space<vmem>>, vector<1x4x128xbf16>
    %253 = vector.shape_cast %252 : vector<1x4x128xbf16> to vector<4x128xbf16>
    %cst_291 = arith.constant dense<0.000000e+00> : vector<8x128xf32>
    %254 = tpu.matmul %247, %253, %cst_291 {dimension_numbers = #tpu.dot_dimension_numbers<[1], [0], [0], [1], [0, 0, 1, 1], [], []>} : vector<8x4xbf16>, vector<4x128xbf16>, vector<8x128xf32> -> vector<8x128xf32>
    %255 = arith.addf %251, %254 : vector<8x128xf32>
    %c0_292 = arith.constant 0 : index
    %c12 = arith.constant 12 : index
    %c0_293 = arith.constant 0 : index
    %c0_294 = arith.constant 0 : index
    %256 = vector.load %arg2[%c0_292, %c12, %c0_293, %c0_294] : memref<1x16x9x8xbf16, #tpu.memory_space<vmem>>, vector<1x1x8x8xbf16>
    %257 = vector.shape_cast %256 : vector<1x1x8x8xbf16> to vector<8x8xbf16>
    %c0_295 = arith.constant 0 : index
    %c12_296 = arith.constant 12 : index
    %c1_297 = arith.constant 1 : index
    %c0_298 = arith.constant 0 : index
    %258 = vector.load %arg2[%c0_295, %c12_296, %c1_297, %c0_298] : memref<1x16x9x8xbf16, #tpu.memory_space<vmem>>, vector<1x1x8x4xbf16>
    %259 = vector.shape_cast %258 : vector<1x1x8x4xbf16> to vector<8x4xbf16>
    %c2_299 = arith.constant 2 : index
    %c0_300 = arith.constant 0 : index
    %c0_301 = arith.constant 0 : index
    %260 = vector.load %arg4[%c2_299, %c0_300, %c0_301] : memref<3x8x128xbf16, #tpu.memory_space<vmem>>, vector<1x8x128xbf16>
    %261 = vector.shape_cast %260 : vector<1x8x128xbf16> to vector<8x128xbf16>
    %cst_302 = arith.constant dense<0.000000e+00> : vector<8x128xf32>
    %262 = tpu.matmul %257, %261, %cst_302 {dimension_numbers = #tpu.dot_dimension_numbers<[1], [0], [0], [1], [0, 0, 1, 1], [], []>} : vector<8x8xbf16>, vector<8x128xbf16>, vector<8x128xf32> -> vector<8x128xf32>
    %263 = arith.addf %255, %262 : vector<8x128xf32>
    %c2_303 = arith.constant 2 : index
    %c0_304 = arith.constant 0 : index
    %c0_305 = arith.constant 0 : index
    %264 = vector.load %arg5[%c2_303, %c0_304, %c0_305] : memref<3x4x128xbf16, #tpu.memory_space<vmem>>, vector<1x4x128xbf16>
    %265 = vector.shape_cast %264 : vector<1x4x128xbf16> to vector<4x128xbf16>
    %cst_306 = arith.constant dense<0.000000e+00> : vector<8x128xf32>
    %266 = tpu.matmul %259, %265, %cst_306 {dimension_numbers = #tpu.dot_dimension_numbers<[1], [0], [0], [1], [0, 0, 1, 1], [], []>} : vector<8x4xbf16>, vector<4x128xbf16>, vector<8x128xf32> -> vector<8x128xf32>
    %267 = arith.addf %263, %266 : vector<8x128xf32>
    %268 = vector.broadcast %0 : vector<1x128xf32> to vector<8x128xf32>
    %269 = arith.addf %267, %268 : vector<8x128xf32>
    %cst_307 = arith.constant 1.000000e-01 : f32
    %270 = vector.broadcast %cst_307 : f32 to vector<8x128xf32>
    %271 = arith.mulf %270, %269 : vector<8x128xf32>
    %272 = arith.maximumf %269, %271 : vector<8x128xf32>
    %273 = arith.truncf %272 : vector<8x128xf32> to vector<8x128xbf16>
    %c0_308 = arith.constant 0 : index
    %c5_309 = arith.constant 5 : index
    %c0_310 = arith.constant 0 : index
    %c0_311 = arith.constant 0 : index
    %274 = vector.load %arg7[%c0_308, %c5_309, %c0_310, %c0_311] : memref<1x8x8x128xbf16, #tpu.memory_space<vmem>>, vector<1x1x8x128xbf16>
    %275 = vector.shape_cast %274 : vector<1x1x8x128xbf16> to vector<8x128xbf16>
    %276 = vector.shape_cast %273 : vector<8x128xbf16> to vector<1x1x8x128xbf16>
    tpu.vector_store %arg7[%c0_308, %c5_309, %c0_310, %c0_311], %276 {strides = array<i32>} : memref<1x8x8x128xbf16, #tpu.memory_space<vmem>>, vector<1x1x8x128xbf16>,
    %cst_312 = arith.constant 0.000000e+00 : f32
    %277 = vector.broadcast %cst_312 : f32 to vector<8x128xf32>
    %c0_313 = arith.constant 0 : index
    %c12_314 = arith.constant 12 : index
    %c0_315 = arith.constant 0 : index
    %c0_316 = arith.constant 0 : index
    %278 = vector.load %arg2[%c0_313, %c12_314, %c0_315, %c0_316] : memref<1x16x9x8xbf16, #tpu.memory_space<vmem>>, vector<1x1x8x8xbf16>
    %279 = vector.shape_cast %278 : vector<1x1x8x8xbf16> to vector<8x8xbf16>
    %c0_317 = arith.constant 0 : index
    %c12_318 = arith.constant 12 : index
    %c1_319 = arith.constant 1 : index
    %c0_320 = arith.constant 0 : index
    %280 = vector.load %arg2[%c0_317, %c12_318, %c1_319, %c0_320] : memref<1x16x9x8xbf16, #tpu.memory_space<vmem>>, vector<1x1x8x4xbf16>
    %281 = vector.shape_cast %280 : vector<1x1x8x4xbf16> to vector<8x4xbf16>
    %c0_321 = arith.constant 0 : index
    %c0_322 = arith.constant 0 : index
    %c0_323 = arith.constant 0 : index
    %282 = vector.load %arg4[%c0_321, %c0_322, %c0_323] : memref<3x8x128xbf16, #tpu.memory_space<vmem>>, vector<1x8x128xbf16>
    %283 = vector.shape_cast %282 : vector<1x8x128xbf16> to vector<8x128xbf16>
    %cst_324 = arith.constant dense<0.000000e+00> : vector<8x128xf32>
    %284 = tpu.matmul %279, %283, %cst_324 {dimension_numbers = #tpu.dot_dimension_numbers<[1], [0], [0], [1], [0, 0, 1, 1], [], []>} : vector<8x8xbf16>, vector<8x128xbf16>, vector<8x128xf32> -> vector<8x128xf32>
    %285 = arith.addf %277, %284 : vector<8x128xf32>
    %c0_325 = arith.constant 0 : index
    %c0_326 = arith.constant 0 : index
    %c0_327 = arith.constant 0 : index
    %286 = vector.load %arg5[%c0_325, %c0_326, %c0_327] : memref<3x4x128xbf16, #tpu.memory_space<vmem>>, vector<1x4x128xbf16>
    %287 = vector.shape_cast %286 : vector<1x4x128xbf16> to vector<4x128xbf16>
    %cst_328 = arith.constant dense<0.000000e+00> : vector<8x128xf32>
    %288 = tpu.matmul %281, %287, %cst_328 {dimension_numbers = #tpu.dot_dimension_numbers<[1], [0], [0], [1], [0, 0, 1, 1], [], []>} : vector<8x4xbf16>, vector<4x128xbf16>, vector<8x128xf32> -> vector<8x128xf32>
    %289 = arith.addf %285, %288 : vector<8x128xf32>
    %c0_329 = arith.constant 0 : index
    %c13 = arith.constant 13 : index
    %c0_330 = arith.constant 0 : index
    %c0_331 = arith.constant 0 : index
    %290 = vector.load %arg2[%c0_329, %c13, %c0_330, %c0_331] : memref<1x16x9x8xbf16, #tpu.memory_space<vmem>>, vector<1x1x8x8xbf16>
    %291 = vector.shape_cast %290 : vector<1x1x8x8xbf16> to vector<8x8xbf16>
    %c0_332 = arith.constant 0 : index
    %c13_333 = arith.constant 13 : index
    %c1_334 = arith.constant 1 : index
    %c0_335 = arith.constant 0 : index
    %292 = vector.load %arg2[%c0_332, %c13_333, %c1_334, %c0_335] : memref<1x16x9x8xbf16, #tpu.memory_space<vmem>>, vector<1x1x8x4xbf16>
    %293 = vector.shape_cast %292 : vector<1x1x8x4xbf16> to vector<8x4xbf16>
    %c1_336 = arith.constant 1 : index
    %c0_337 = arith.constant 0 : index
    %c0_338 = arith.constant 0 : index
    %294 = vector.load %arg4[%c1_336, %c0_337, %c0_338] : memref<3x8x128xbf16, #tpu.memory_space<vmem>>, vector<1x8x128xbf16>
    %295 = vector.shape_cast %294 : vector<1x8x128xbf16> to vector<8x128xbf16>
    %cst_339 = arith.constant dense<0.000000e+00> : vector<8x128xf32>
    %296 = tpu.matmul %291, %295, %cst_339 {dimension_numbers = #tpu.dot_dimension_numbers<[1], [0], [0], [1], [0, 0, 1, 1], [], []>} : vector<8x8xbf16>, vector<8x128xbf16>, vector<8x128xf32> -> vector<8x128xf32>
    %297 = arith.addf %289, %296 : vector<8x128xf32>
    %c1_340 = arith.constant 1 : index
    %c0_341 = arith.constant 0 : index
    %c0_342 = arith.constant 0 : index
    %298 = vector.load %arg5[%c1_340, %c0_341, %c0_342] : memref<3x4x128xbf16, #tpu.memory_space<vmem>>, vector<1x4x128xbf16>
    %299 = vector.shape_cast %298 : vector<1x4x128xbf16> to vector<4x128xbf16>
    %cst_343 = arith.constant dense<0.000000e+00> : vector<8x128xf32>
    %300 = tpu.matmul %293, %299, %cst_343 {dimension_numbers = #tpu.dot_dimension_numbers<[1], [0], [0], [1], [0, 0, 1, 1], [], []>} : vector<8x4xbf16>, vector<4x128xbf16>, vector<8x128xf32> -> vector<8x128xf32>
    %301 = arith.addf %297, %300 : vector<8x128xf32>
    %c0_344 = arith.constant 0 : index
    %c14 = arith.constant 14 : index
    %c0_345 = arith.constant 0 : index
    %c0_346 = arith.constant 0 : index
    %302 = vector.load %arg2[%c0_344, %c14, %c0_345, %c0_346] : memref<1x16x9x8xbf16, #tpu.memory_space<vmem>>, vector<1x1x8x8xbf16>
    %303 = vector.shape_cast %302 : vector<1x1x8x8xbf16> to vector<8x8xbf16>
    %c0_347 = arith.constant 0 : index
    %c14_348 = arith.constant 14 : index
    %c1_349 = arith.constant 1 : index
    %c0_350 = arith.constant 0 : index
    %304 = vector.load %arg2[%c0_347, %c14_348, %c1_349, %c0_350] : memref<1x16x9x8xbf16, #tpu.memory_space<vmem>>, vector<1x1x8x4xbf16>
    %305 = vector.shape_cast %304 : vector<1x1x8x4xbf16> to vector<8x4xbf16>
    %c2_351 = arith.constant 2 : index
    %c0_352 = arith.constant 0 : index
    %c0_353 = arith.constant 0 : index
    %306 = vector.load %arg4[%c2_351, %c0_352, %c0_353] : memref<3x8x128xbf16, #tpu.memory_space<vmem>>, vector<1x8x128xbf16>
    %307 = vector.shape_cast %306 : vector<1x8x128xbf16> to vector<8x128xbf16>
    %cst_354 = arith.constant dense<0.000000e+00> : vector<8x128xf32>
    %308 = tpu.matmul %303, %307, %cst_354 {dimension_numbers = #tpu.dot_dimension_numbers<[1], [0], [0], [1], [0, 0, 1, 1], [], []>} : vector<8x8xbf16>, vector<8x128xbf16>, vector<8x128xf32> -> vector<8x128xf32>
    %309 = arith.addf %301, %308 : vector<8x128xf32>
    %c2_355 = arith.constant 2 : index
    %c0_356 = arith.constant 0 : index
    %c0_357 = arith.constant 0 : index
    %310 = vector.load %arg5[%c2_355, %c0_356, %c0_357] : memref<3x4x128xbf16, #tpu.memory_space<vmem>>, vector<1x4x128xbf16>
    %311 = vector.shape_cast %310 : vector<1x4x128xbf16> to vector<4x128xbf16>
    %cst_358 = arith.constant dense<0.000000e+00> : vector<8x128xf32>
    %312 = tpu.matmul %305, %311, %cst_358 {dimension_numbers = #tpu.dot_dimension_numbers<[1], [0], [0], [1], [0, 0, 1, 1], [], []>} : vector<8x4xbf16>, vector<4x128xbf16>, vector<8x128xf32> -> vector<8x128xf32>
    %313 = arith.addf %309, %312 : vector<8x128xf32>
    %314 = vector.broadcast %0 : vector<1x128xf32> to vector<8x128xf32>
    %315 = arith.addf %313, %314 : vector<8x128xf32>
    %cst_359 = arith.constant 1.000000e-01 : f32
    %316 = vector.broadcast %cst_359 : f32 to vector<8x128xf32>
    %317 = arith.mulf %316, %315 : vector<8x128xf32>
    %318 = arith.maximumf %315, %317 : vector<8x128xf32>
    %319 = arith.truncf %318 : vector<8x128xf32> to vector<8x128xbf16>
    %c0_360 = arith.constant 0 : index
    %c6_361 = arith.constant 6 : index
    %c0_362 = arith.constant 0 : index
    %c0_363 = arith.constant 0 : index
    %320 = vector.load %arg7[%c0_360, %c6_361, %c0_362, %c0_363] : memref<1x8x8x128xbf16, #tpu.memory_space<vmem>>, vector<1x1x8x128xbf16>
    %321 = vector.shape_cast %320 : vector<1x1x8x128xbf16> to vector<8x128xbf16>
    %322 = vector.shape_cast %319 : vector<8x128xbf16> to vector<1x1x8x128xbf16>
    tpu.vector_store %arg7[%c0_360, %c6_361, %c0_362, %c0_363], %322 {strides = array<i32>} : memref<1x8x8x128xbf16, #tpu.memory_space<vmem>>, vector<1x1x8x128xbf16>,
    %cst_364 = arith.constant 0.000000e+00 : f32
    %323 = vector.broadcast %cst_364 : f32 to vector<8x128xf32>
    %c0_365 = arith.constant 0 : index
    %c14_366 = arith.constant 14 : index
    %c0_367 = arith.constant 0 : index
    %c0_368 = arith.constant 0 : index
    %324 = vector.load %arg2[%c0_365, %c14_366, %c0_367, %c0_368] : memref<1x16x9x8xbf16, #tpu.memory_space<vmem>>, vector<1x1x8x8xbf16>
    %325 = vector.shape_cast %324 : vector<1x1x8x8xbf16> to vector<8x8xbf16>
    %c0_369 = arith.constant 0 : index
    %c14_370 = arith.constant 14 : index
    %c1_371 = arith.constant 1 : index
    %c0_372 = arith.constant 0 : index
    %326 = vector.load %arg2[%c0_369, %c14_370, %c1_371, %c0_372] : memref<1x16x9x8xbf16, #tpu.memory_space<vmem>>, vector<1x1x8x4xbf16>
    %327 = vector.shape_cast %326 : vector<1x1x8x4xbf16> to vector<8x4xbf16>
    %c0_373 = arith.constant 0 : index
    %c0_374 = arith.constant 0 : index
    %c0_375 = arith.constant 0 : index
    %328 = vector.load %arg4[%c0_373, %c0_374, %c0_375] : memref<3x8x128xbf16, #tpu.memory_space<vmem>>, vector<1x8x128xbf16>
    %329 = vector.shape_cast %328 : vector<1x8x128xbf16> to vector<8x128xbf16>
    %cst_376 = arith.constant dense<0.000000e+00> : vector<8x128xf32>
    %330 = tpu.matmul %325, %329, %cst_376 {dimension_numbers = #tpu.dot_dimension_numbers<[1], [0], [0], [1], [0, 0, 1, 1], [], []>} : vector<8x8xbf16>, vector<8x128xbf16>, vector<8x128xf32> -> vector<8x128xf32>
    %331 = arith.addf %323, %330 : vector<8x128xf32>
    %c0_377 = arith.constant 0 : index
    %c0_378 = arith.constant 0 : index
    %c0_379 = arith.constant 0 : index
    %332 = vector.load %arg5[%c0_377, %c0_378, %c0_379] : memref<3x4x128xbf16, #tpu.memory_space<vmem>>, vector<1x4x128xbf16>
    %333 = vector.shape_cast %332 : vector<1x4x128xbf16> to vector<4x128xbf16>
    %cst_380 = arith.constant dense<0.000000e+00> : vector<8x128xf32>
    %334 = tpu.matmul %327, %333, %cst_380 {dimension_numbers = #tpu.dot_dimension_numbers<[1], [0], [0], [1], [0, 0, 1, 1], [], []>} : vector<8x4xbf16>, vector<4x128xbf16>, vector<8x128xf32> -> vector<8x128xf32>
    %335 = arith.addf %331, %334 : vector<8x128xf32>
    %c0_381 = arith.constant 0 : index
    %c15 = arith.constant 15 : index
    %c0_382 = arith.constant 0 : index
    %c0_383 = arith.constant 0 : index
    %336 = vector.load %arg2[%c0_381, %c15, %c0_382, %c0_383] : memref<1x16x9x8xbf16, #tpu.memory_space<vmem>>, vector<1x1x8x8xbf16>
    %337 = vector.shape_cast %336 : vector<1x1x8x8xbf16> to vector<8x8xbf16>
    %c0_384 = arith.constant 0 : index
    %c15_385 = arith.constant 15 : index
    %c1_386 = arith.constant 1 : index
    %c0_387 = arith.constant 0 : index
    %338 = vector.load %arg2[%c0_384, %c15_385, %c1_386, %c0_387] : memref<1x16x9x8xbf16, #tpu.memory_space<vmem>>, vector<1x1x8x4xbf16>
    %339 = vector.shape_cast %338 : vector<1x1x8x4xbf16> to vector<8x4xbf16>
    %c1_388 = arith.constant 1 : index
    %c0_389 = arith.constant 0 : index
    %c0_390 = arith.constant 0 : index
    %340 = vector.load %arg4[%c1_388, %c0_389, %c0_390] : memref<3x8x128xbf16, #tpu.memory_space<vmem>>, vector<1x8x128xbf16>
    %341 = vector.shape_cast %340 : vector<1x8x128xbf16> to vector<8x128xbf16>
    %cst_391 = arith.constant dense<0.000000e+00> : vector<8x128xf32>
    %342 = tpu.matmul %337, %341, %cst_391 {dimension_numbers = #tpu.dot_dimension_numbers<[1], [0], [0], [1], [0, 0, 1, 1], [], []>} : vector<8x8xbf16>, vector<8x128xbf16>, vector<8x128xf32> -> vector<8x128xf32>
    %343 = arith.addf %335, %342 : vector<8x128xf32>
    %c1_392 = arith.constant 1 : index
    %c0_393 = arith.constant 0 : index
    %c0_394 = arith.constant 0 : index
    %344 = vector.load %arg5[%c1_392, %c0_393, %c0_394] : memref<3x4x128xbf16, #tpu.memory_space<vmem>>, vector<1x4x128xbf16>
    %345 = vector.shape_cast %344 : vector<1x4x128xbf16> to vector<4x128xbf16>
    %cst_395 = arith.constant dense<0.000000e+00> : vector<8x128xf32>
    %346 = tpu.matmul %339, %345, %cst_395 {dimension_numbers = #tpu.dot_dimension_numbers<[1], [0], [0], [1], [0, 0, 1, 1], [], []>} : vector<8x4xbf16>, vector<4x128xbf16>, vector<8x128xf32> -> vector<8x128xf32>
    %347 = arith.addf %343, %346 : vector<8x128xf32>
    %c0_396 = arith.constant 0 : index
    %c0_397 = arith.constant 0 : index
    %c0_398 = arith.constant 0 : index
    %c0_399 = arith.constant 0 : index
    %348 = vector.load %arg3[%c0_396, %c0_397, %c0_398, %c0_399] : memref<1x1x9x8xbf16, #tpu.memory_space<vmem>>, vector<1x1x8x8xbf16>
    %349 = vector.shape_cast %348 : vector<1x1x8x8xbf16> to vector<8x8xbf16>
    %c0_400 = arith.constant 0 : index
    %c0_401 = arith.constant 0 : index
    %c1_402 = arith.constant 1 : index
    %c0_403 = arith.constant 0 : index
    %350 = vector.load %arg3[%c0_400, %c0_401, %c1_402, %c0_403] : memref<1x1x9x8xbf16, #tpu.memory_space<vmem>>, vector<1x1x8x4xbf16>
    %351 = vector.shape_cast %350 : vector<1x1x8x4xbf16> to vector<8x4xbf16>
    %c2_404 = arith.constant 2 : index
    %c0_405 = arith.constant 0 : index
    %c0_406 = arith.constant 0 : index
    %352 = vector.load %arg4[%c2_404, %c0_405, %c0_406] : memref<3x8x128xbf16, #tpu.memory_space<vmem>>, vector<1x8x128xbf16>
    %353 = vector.shape_cast %352 : vector<1x8x128xbf16> to vector<8x128xbf16>
    %cst_407 = arith.constant dense<0.000000e+00> : vector<8x128xf32>
    %354 = tpu.matmul %349, %353, %cst_407 {dimension_numbers = #tpu.dot_dimension_numbers<[1], [0], [0], [1], [0, 0, 1, 1], [], []>} : vector<8x8xbf16>, vector<8x128xbf16>, vector<8x128xf32> -> vector<8x128xf32>
    %355 = arith.addf %347, %354 : vector<8x128xf32>
    %c2_408 = arith.constant 2 : index
    %c0_409 = arith.constant 0 : index
    %c0_410 = arith.constant 0 : index
    %356 = vector.load %arg5[%c2_408, %c0_409, %c0_410] : memref<3x4x128xbf16, #tpu.memory_space<vmem>>, vector<1x4x128xbf16>
    %357 = vector.shape_cast %356 : vector<1x4x128xbf16> to vector<4x128xbf16>
    %cst_411 = arith.constant dense<0.000000e+00> : vector<8x128xf32>
    %358 = tpu.matmul %351, %357, %cst_411 {dimension_numbers = #tpu.dot_dimension_numbers<[1], [0], [0], [1], [0, 0, 1, 1], [], []>} : vector<8x4xbf16>, vector<4x128xbf16>, vector<8x128xf32> -> vector<8x128xf32>
    %359 = arith.addf %355, %358 : vector<8x128xf32>
    %360 = vector.broadcast %0 : vector<1x128xf32> to vector<8x128xf32>
    %361 = arith.addf %359, %360 : vector<8x128xf32>
    %cst_412 = arith.constant 1.000000e-01 : f32
    %362 = vector.broadcast %cst_412 : f32 to vector<8x128xf32>
    %363 = arith.mulf %362, %361 : vector<8x128xf32>
    %364 = arith.maximumf %361, %363 : vector<8x128xf32>
    %365 = arith.truncf %364 : vector<8x128xf32> to vector<8x128xbf16>
    %c0_413 = arith.constant 0 : index
    %c7_414 = arith.constant 7 : index
    %c0_415 = arith.constant 0 : index
    %c0_416 = arith.constant 0 : index
    %366 = vector.load %arg7[%c0_413, %c7_414, %c0_415, %c0_416] : memref<1x8x8x128xbf16, #tpu.memory_space<vmem>>, vector<1x1x8x128xbf16>
    %367 = vector.shape_cast %366 : vector<1x1x8x128xbf16> to vector<8x128xbf16>
    %368 = vector.shape_cast %365 : vector<8x128xbf16> to vector<1x1x8x128xbf16>
    tpu.vector_store %arg7[%c0_413, %c7_414, %c0_415, %c0_416], %368 {strides = array<i32>} : memref<1x8x8x128xbf16, #tpu.memory_space<vmem>>, vector<1x1x8x128xbf16>,
    return
  }
  func.func @transform_0(%arg0: i32, %arg1: i32) -> (i32, i32, i32, i32) {
    %c0_i32 = arith.constant 0 : i32
    %c0_i32_0 = arith.constant 0 : i32
    %c0_i32_1 = arith.constant 0 : i32
    return %arg0, %arg1, %c0_i32, %c0_i32_0 : i32, i32, i32, i32
  }
  func.func @transform_1(%arg0: i32, %arg1: i32) -> (i32, i32, i32, i32) {
    %c1_i32 = arith.constant 1 : i32
    %0 = arith.addi %arg1, %c1_i32 : i32
    %c16_i32 = arith.constant 16 : i32
    %1 = arith.muli %c16_i32, %0 : i32
    %c0_i32 = arith.constant 0 : i32
    %c0_i32_0 = arith.constant 0 : i32
    %c0_i32_1 = arith.constant 0 : i32
    return %arg0, %1, %c0_i32, %c0_i32_0 : i32, i32, i32, i32
  }
  func.func @transform_2(%arg0: i32, %arg1: i32) -> (i32, i32, i32) {
    %c0_i32 = arith.constant 0 : i32
    %c0_i32_0 = arith.constant 0 : i32
    %c0_i32_1 = arith.constant 0 : i32
    %c0_i32_2 = arith.constant 0 : i32
    return %c0_i32, %c0_i32_0, %c0_i32_1 : i32, i32, i32
  }
  func.func @transform_3(%arg0: i32, %arg1: i32) -> (i32, i32, i32) {
    %c0_i32 = arith.constant 0 : i32
    %c0_i32_0 = arith.constant 0 : i32
    %c0_i32_1 = arith.constant 0 : i32
    %c0_i32_2 = arith.constant 0 : i32
    return %c0_i32, %c0_i32_0, %c0_i32_1 : i32, i32, i32
  }
  func.func @transform_4(%arg0: i32, %arg1: i32) -> (i32, i32) {
    %c0_i32 = arith.constant 0 : i32
    %c0_i32_0 = arith.constant 0 : i32
    %c0_i32_1 = arith.constant 0 : i32
    return %c0_i32, %c0_i32_0 : i32, i32
  }
  func.func @transform_5(%arg0: i32, %arg1: i32) -> (i32, i32, i32, i32) {
    %c0_i32 = arith.constant 0 : i32
    %c0_i32_0 = arith.constant 0 : i32
    %c0_i32_1 = arith.constant 0 : i32
    return %arg0, %arg1, %c0_i32, %c0_i32_0 : i32, i32, i32, i32
  }
}

</mosaic_0001>

<llo_original>
// kernel: downsampling_forward.1
$region0: #{downsampling_forward.1}
  #allocation0 [shape = 'u32[]', space=smem, size = 0x4, offset = 0x4, fixed_abs, tag = 'smem constant byte address 0x4 - core index']
  #allocation1 [shape = 'u32[72,128]{1,0:T(1,128)}', space=vmem, size = 0x9000, scoped, tag = 'internal scratch']
  %s0 = inlined_call_operand.vmem [shape: bf16[2,32,9,8], index: 0, kind: input, shape index: {}, may-alias: {0,1}]
  %s1 = inlined_call_operand.vmem [shape: bf16[2,32,9,8], index: 1, kind: input, shape index: {}, may-alias: {0,1}]
  %s2 = inlined_call_operand.vmem [shape: bf16[3,8,128], index: 2, kind: input, shape index: {}]
  %s3 = inlined_call_operand.vmem [shape: bf16[3,4,128], index: 3, kind: input, shape index: {}]
  %s4 = inlined_call_operand.vmem [shape: f32[1,128], index: 4, kind: input, shape index: {}]
  %s5 = inlined_call_operand.vmem [shape: bf16[2,8,8,128], index: 5, kind: output, shape index: {}]
  %s6 = sld [smem:[#allocation0]]
  $region53: #{downsampling_forward.1} parent=0
    _
  %s8 = ssub.s32 1, %s6
  %s9 = scalar_select 0, %s8, %s6
  loop: start=0, step=1, limit=4
  $region2: #{downsampling_forward.1} parent=0 // loop_pre_header
    _
  $region3: #{downsampling_forward.1} parent=0 // loop_header
    %s11 = sphi 0, %s15
    %p12 = scmp.ge.s32.totalorder %s11, 4
    %s18 = sphi 0, %s30
    %s19 = sphi 0, %s26
    %s20 = sphi 0, %s18
    %s21 = sphi 0, %s19
    %s22 = sphi 0, %s20
    %s23 = sphi 0, %s21
    %s35 = sphi 0, %s37
    %s38 = sphi 0, %s35
    %s39 = sphi 0, %s38
    %s55 = sphi 0, %s39
    %s67 = sphi 0, %s69
    %s70 = sphi 0, %s67
    %s71 = sphi 0, %s70
    %s87 = sphi 0, %s71
    %s91 = sphi 0, %s91
    %s93 = sphi 0, %s91
    %s94 = sphi 0, %s93
    %s108 = sphi 0, %s94
    %s112 = sphi 0, %s112
    %s114 = sphi 0, %s112
    %s115 = sphi 0, %s114
    %s129 = sphi 0, %s115
    %s133 = sphi 0, %s133
    %s135 = sphi 0, %s133
    %s136 = sphi 0, %s135
    %s150 = sphi 0, %s136
    %s158 = sphi 0, %s160
    %s161 = sphi 0, %s158
    %s162 = sphi 0, %s161
    %s178 = sphi 0, %s162
  $region4: #{downsampling_forward.1} parent=0 // loop_header_branch
    %14 = sbr.rel (%p12) target = $region8
  $region5: #{downsampling_forward.1} parent=0 // loop_body
    %s16 = ssub.s32 %s11, 1
    %s17 = ssub.s32 %s11, 2
    %s24 = sadd.s32 1, %s19
    %p25 = scmp.ge.s32.totalorder %s24, 1
    %s26 = scalar_select %p25, 0, %s24
    %s27 = sadd.s32 1, %s18
    %s28 = scalar_select %p25, %s27, %s18
    %p29 = scmp.ge.s32.totalorder %s28, 2
    %s30 = scalar_select %p29, 0, %s28
    %s31 = ssub.s32 %s18, %s30
    %s32 = ssub.s32 %s19, %s26
    %s33 = sor.u32 %s31, %s32
    %p34 = scmp.eq.s32.totalorder %s33, 0
    %s36 = sadd.s32 %s35, 1
    %s37 = scalar_select %p34, %s35, %s36
    %p40 = pneg %p34
    %p41 = scmp.eq.s32.totalorder %s11, 1
    %p42 = por %p40, %p41
    %p43 = scmp.ne.s32.totalorder %s35, %s38
    %p44 = scmp.eq.s32.totalorder %s11, 0
    %p45 = por %p43, %p44
    %p46 = scmp.ne.s32.totalorder %s35, %s38
    %p47 = scmp.eq.s32.totalorder %s16, 1
    %p48 = por %p46, %p47
    %p49 = scmp.ne.s32.totalorder %s38, %s39
    %p50 = scmp.eq.s32.totalorder %s16, 0
    %p51 = por %p49, %p50
    %p52 = scmp.ne.s32.totalorder %s38, %s39
    %p53 = scmp.eq.s32.totalorder %s17, 1
    %p54 = por %p52, %p53
    %p56 = scmp.ne.s32.totalorder %s39, %s55
    %p57 = scmp.eq.s32.totalorder %s17, 0
    %p58 = por %p56, %p57
    %s59 = sadd.s32 %s19, 1
    %s60 = smul.u32 %s59, 16
    %s61 = sadd.s32 %s26, 1
    %s62 = smul.u32 %s61, 16
    %s63 = ssub.s32 %s18, %s30
    %s64 = ssub.s32 %s60, %s62
    %s65 = sor.u32 %s63, %s64
    %p66 = scmp.eq.s32.totalorder %s65, 0
    %s68 = sadd.s32 %s67, 1
    %s69 = scalar_select %p66, %s67, %s68
    %p72 = pneg %p66
    %p73 = scmp.eq.s32.totalorder %s11, 1
    %p74 = por %p72, %p73
    %p75 = scmp.ne.s32.totalorder %s67, %s70
    %p76 = scmp.eq.s32.totalorder %s11, 0
    %p77 = por %p75, %p76
    %p78 = scmp.ne.s32.totalorder %s67, %s70
    %p79 = scmp.eq.s32.totalorder %s16, 1
    %p80 = por %p78, %p79
    %p81 = scmp.ne.s32.totalorder %s70, %s71
    %p82 = scmp.eq.s32.totalorder %s16, 0
    %p83 = por %p81, %p82
    %p84 = scmp.ne.s32.totalorder %s70, %s71
    %p85 = scmp.eq.s32.totalorder %s17, 1
    %p86 = por %p84, %p85
    %p88 = scmp.ne.s32.totalorder %s71, %s87
    %p89 = scmp.eq.s32.totalorder %s17, 0
    %p90 = por %p88, %p89
    %s92 = sadd.s32 %s91, 1
    %p95 = scmp.eq.s32.totalorder %s11, 1
    %p96 = scmp.ne.s32.totalorder %s91, %s93
    %p97 = scmp.eq.s32.totalorder %s11, 0
    %p98 = por %p96, %p97
    %p99 = scmp.ne.s32.totalorder %s91, %s93
    %p100 = scmp.eq.s32.totalorder %s16, 1
    %p101 = por %p99, %p100
    %p102 = scmp.ne.s32.totalorder %s93, %s94
    %p103 = scmp.eq.s32.totalorder %s16, 0
    %p104 = por %p102, %p103
    %p105 = scmp.ne.s32.totalorder %s93, %s94
    %p106 = scmp.eq.s32.totalorder %s17, 1
    %p107 = por %p105, %p106
    %p109 = scmp.ne.s32.totalorder %s94, %s108
    %p110 = scmp.eq.s32.totalorder %s17, 0
    %p111 = por %p109, %p110
    %s113 = sadd.s32 %s112, 1
    %p116 = scmp.eq.s32.totalorder %s11, 1
    %p117 = scmp.ne.s32.totalorder %s112, %s114
    %p118 = scmp.eq.s32.totalorder %s11, 0
    %p119 = por %p117, %p118
    %p120 = scmp.ne.s32.totalorder %s112, %s114
    %p121 = scmp.eq.s32.totalorder %s16, 1
    %p122 = por %p120, %p121
    %p123 = scmp.ne.s32.totalorder %s114, %s115
    %p124 = scmp.eq.s32.totalorder %s16, 0
    %p125 = por %p123, %p124
    %p126 = scmp.ne.s32.totalorder %s114, %s115
    %p127 = scmp.eq.s32.totalorder %s17, 1
    %p128 = por %p126, %p127
    %p130 = scmp.ne.s32.totalorder %s115, %s129
    %p131 = scmp.eq.s32.totalorder %s17, 0
    %p132 = por %p130, %p131
    %s134 = sadd.s32 %s133, 1
    %p137 = scmp.eq.s32.totalorder %s11, 1
    %p138 = scmp.ne.s32.totalorder %s133, %s135
    %p139 = scmp.eq.s32.totalorder %s11, 0
    %p140 = por %p138, %p139
    %p141 = scmp.ne.s32.totalorder %s133, %s135
    %p142 = scmp.eq.s32.totalorder %s16, 1
    %p143 = por %p141, %p142
    %p144 = scmp.ne.s32.totalorder %s135, %s136
    %p145 = scmp.eq.s32.totalorder %s16, 0
    %p146 = por %p144, %p145
    %p147 = scmp.ne.s32.totalorder %s135, %s136
    %p148 = scmp.eq.s32.totalorder %s17, 1
    %p149 = por %p147, %p148
    %p151 = scmp.ne.s32.totalorder %s136, %s150
    %p152 = scmp.eq.s32.totalorder %s17, 0
    %p153 = por %p151, %p152
    %s154 = ssub.s32 %s18, %s30
    %s155 = ssub.s32 %s19, %s26
    %s156 = sor.u32 %s154, %s155
    %p157 = scmp.eq.s32.totalorder %s156, 0
    %s159 = sadd.s32 %s158, 1
    %s160 = scalar_select %p157, %s158, %s159
    %p163 = pneg %p157
    %p164 = scmp.eq.s32.totalorder %s11, 1
    %p165 = por %p163, %p164
    %p166 = scmp.ne.s32.totalorder %s158, %s161
    %p167 = scmp.eq.s32.totalorder %s11, 0
    %p168 = por %p166, %p167
    %p169 = scmp.ne.s32.totalorder %s158, %s161
    %p170 = scmp.eq.s32.totalorder %s16, 1
    %p171 = por %p169, %p170
    %p172 = scmp.ne.s32.totalorder %s161, %s162
    %p173 = scmp.eq.s32.totalorder %s16, 0
    %p174 = por %p172, %p173
    %p175 = scmp.ne.s32.totalorder %s161, %s162
    %p176 = scmp.eq.s32.totalorder %s17, 1
    %p177 = por %p175, %p176
    %p179 = scmp.ne.s32.totalorder %s162, %s178
    %p180 = scmp.eq.s32.totalorder %s17, 0
    %p181 = por %p179, %p180
    %p182 = scmp.le.s32.totalorder 1, %s11
    %p183 = scmp.lt.s32.totalorder %s11, 3
    %p184 = pnand %p182, %p183
    %p185 = pneg %p184
    // Predicated region
    $region9: #{downsampling_forward.1} parent=5 // pred_check
      _
    $region10: #{downsampling_forward.1} parent=5 // pred_check_branch
      %187 = sbr.rel (%p184) target = $region12
    $region11: #{downsampling_forward.1} parent=5 // pred_region
      %s188 = ssub.s32 %s11, 1
      // Predicated region
      $region13: #{downsampling_forward.1} parent=11 // pred_check
        %p189 = pneg %p104
      $region14: #{downsampling_forward.1} parent=11 // pred_check_branch
        %191 = sbr.rel (%p189) target = $region16
      $region15: #{downsampling_forward.1} parent=11 // pred_region
        _
      $region16: #{downsampling_forward.1} parent=11 // pred_fallthru
        _
      // Predicated region
      $region17: #{downsampling_forward.1} parent=11 // pred_check
        %p192 = pneg %p125
      $region18: #{downsampling_forward.1} parent=11 // pred_check_branch
        %194 = sbr.rel (%p192) target = $region20
      $region19: #{downsampling_forward.1} parent=11 // pred_region
        _
      $region20: #{downsampling_forward.1} parent=11 // pred_fallthru
        _
      // Predicated region
      $region21: #{downsampling_forward.1} parent=11 // pred_check
        %p195 = pneg %p146
      $region22: #{downsampling_forward.1} parent=11 // pred_check_branch
        %197 = sbr.rel (%p195) target = $region24
      $region23: #{downsampling_forward.1} parent=11 // pred_region
        _
      $region24: #{downsampling_forward.1} parent=11 // pred_fallthru
        _
    $region12: #{downsampling_forward.1} parent=5 // pred_fallthru
      _
    %p198 = scmp.lt.s32.totalorder %s11, 2
    // Predicated region
    $region25: #{downsampling_forward.1} parent=5 // pred_check
      %p199 = pneg %p198
    $region26: #{downsampling_forward.1} parent=5 // pred_check_branch
      %201 = sbr.rel (%p199) target = $region28
    $region27: #{downsampling_forward.1} parent=5 // pred_region
      // Predicated region
      $region29: #{downsampling_forward.1} parent=27 // pred_check
        %p202 = pneg %p45
      $region30: #{downsampling_forward.1} parent=27 // pred_check_branch
        %204 = sbr.rel (%p202) target = $region32
      $region31: #{downsampling_forward.1} parent=27 // pred_region
        %s205 = smul.u32 16, %s19
        %p206 = scmp.lt.s32.totalorder %s18, 1
        %s207 = scalar_select %p206, %s18, 1
        %p208 = scmp.lt.s32.totalorder %s205, 31
        %s209 = scalar_select %p208, %s205, 31
        %s210 = smul.addr %s209, 2
        %s211 = smul.addr %s207, 64
        %s212 = sadd.s32 %s210, %s211
        %s213 = smul.addr %s212, 4
        %s214 = scalar_lea.vmem %s0, %s213
        %s215 = smul.u32 16, %s19
      $region32: #{downsampling_forward.1} parent=27 // pred_fallthru
        _
      // Predicated region
      $region33: #{downsampling_forward.1} parent=27 // pred_check
        %p216 = pneg %p77
      $region34: #{downsampling_forward.1} parent=27 // pred_check_branch
        %218 = sbr.rel (%p216) target = $region36
      $region35: #{downsampling_forward.1} parent=27 // pred_region
        %s219 = sadd.s32 %s19, 1
        %s220 = smul.u32 %s219, 16
        %p221 = scmp.lt.s32.totalorder %s18, 1
        %s222 = scalar_select %p221, %s18, 1
        %p223 = scmp.lt.s32.totalorder %s220, 31
        %s224 = scalar_select %p223, %s220, 31
        %s225 = smul.addr %s224, 2
        %s226 = smul.addr %s222, 64
        %s227 = sadd.s32 %s225, %s226
        %s228 = smul.addr %s227, 4
        %s229 = scalar_lea.vmem %s1, %s228
        %s230 = sadd.s32 %s19, 1
        %s231 = smul.u32 %s230, 16
      $region36: #{downsampling_forward.1} parent=27 // pred_fallthru
        _
    $region28: #{downsampling_forward.1} parent=5 // pred_fallthru
      _
    %p232 = scmp.le.s32.totalorder 1, %s11
    %p233 = scmp.lt.s32.totalorder %s11, 3
    %p234 = pnand %p232, %p233
    %p235 = pneg %p234
    // Predicated region
    $region37: #{downsampling_forward.1} parent=5 // pred_check
      _
    $region38: #{downsampling_forward.1} parent=5 // pred_check_branch
      %237 = sbr.rel (%p234) target = $region40
    $region39: #{downsampling_forward.1} parent=5 // pred_region
      %s238 = ssub.s32 %s11, 1
      %s239 = smul.u32 16, %s21
      %p240 = scmp.lt.s32.totalorder %s20, 1
      %s241 = scalar_select %p240, %s20, 1
      %p242 = scmp.lt.s32.totalorder %s239, 31
      %s243 = scalar_select %p242, %s239, 31
      %s244 = smul.addr %s243, 2
      %s245 = smul.addr %s241, 64
      %s246 = sadd.s32 %s244, %s245
      %s247 = smul.addr %s246, 4
      %s248 = scalar_lea.vmem %s0, %s247
      %p249 = pneg %p51
      %p250 = pneg %p48
      %s251 = sadd.s32 %s21, 1
      %s252 = smul.u32 %s251, 16
      %p253 = scmp.lt.s32.totalorder %s20, 1
      %s254 = scalar_select %p253, %s20, 1
      %p255 = scmp.lt.s32.totalorder %s252, 31
      %s256 = scalar_select %p255, %s252, 31
      %s257 = smul.addr %s256, 2
      %s258 = smul.addr %s254, 64
      %s259 = sadd.s32 %s257, %s258
      %s260 = smul.addr %s259, 4
      %s261 = scalar_lea.vmem %s1, %s260
      %p262 = pneg %p83
      %p263 = pneg %p80
      %p264 = pneg %p104
      %p265 = pneg %p101
      %p266 = pneg %p125
      %p267 = pneg %p122
      %p268 = pneg %p146
      %p269 = pneg %p143
      %p270 = pneg %p174
      %p271 = pneg %p171
      %s272 = smul.u32 8, %s21
      %p273 = scmp.lt.s32.totalorder %s20, 1
      %s274 = scalar_select %p273, %s20, 1
      %p275 = scmp.lt.s32.totalorder %s272, 7
      %s276 = scalar_select %p275, %s272, 7
      %s277 = smul.addr %s274, 8
      %s278 = sadd.s32 %s276, %s277
      %s279 = smul.addr %s278, 4
      %s280 = scalar_lea.vmem %s5, %s279
      %s281 = smul.u32 16, %s21
      %p282 = scmp.lt.s32.totalorder %s20, 1
      %s283 = scalar_select %p282, %s20, 1
      %p284 = scmp.lt.s32.totalorder %s281, 31
      %s285 = scalar_select %p284, %s281, 31
      %s286 = smul.addr %s285, 2
      %s287 = smul.addr %s283, 64
      %s288 = sadd.s32 %s286, %s287
      %s289 = smul.addr %s288, 4
      %s290 = scalar_lea.vmem %s0, %s289
      %s291 = smul.u32 16, %s21
      %s292 = sadd.s32 %s21, 1
      %s293 = smul.u32 %s292, 16
      %p294 = scmp.lt.s32.totalorder %s20, 1
      %s295 = scalar_select %p294, %s20, 1
      %p296 = scmp.lt.s32.totalorder %s293, 31
      %s297 = scalar_select %p296, %s293, 31
      %s298 = smul.addr %s297, 2
      %s299 = smul.addr %s295, 64
      %s300 = sadd.s32 %s298, %s299
      %s301 = smul.addr %s300, 4
      %s302 = scalar_lea.vmem %s1, %s301
      %s303 = sadd.s32 %s21, 1
      %s304 = smul.u32 %s303, 16
      %s305 = smul.u32 8, %s21
      %p306 = scmp.lt.s32.totalorder %s20, 1
      %s307 = scalar_select %p306, %s20, 1
      %p308 = scmp.lt.s32.totalorder %s305, 7
      %s309 = scalar_select %p308, %s305, 7
      %s310 = smul.addr %s307, 8
      %s311 = sadd.s32 %s309, %s310
      %s312 = smul.addr %s311, 4
      %s313 = scalar_lea.vmem %s5, %s312
      %s314 = smul.u32 8, %s21
      %v316 = vld [vmem:[%s4] sm:$0x1]
      %v317 = vld [vmem:[%s290] sm:$0xf]
      %v318 = vld [vmem:[%s290 + $0x4] sm:$0x1]
      %v319 = vld [vmem:[%s2] sm:$0xf]
      %v320 = vld [vmem:[%s3] sm:$0x3]
      %v323 = vunpack.c.l.b16 %v317
      %v324 = vunpack.c.l.b16 %v318
      %v325 = vpack.c.b16 %v324, %v323
      %v327 = vshrl.u32 %v325, 16
      %v329 = vshll.u32 %v325, 16
      %v331 = vrot.slane %v329, 1
      %v332 = vor.u32 %v327, %v331
      %vm333 = vcmask 31744
      %v335 = vsel %vm333, %v332, 0
      %vm337 = vcmask 1041408
      %v339 = vsel %vm337, %v320, 0
      %341 = vmatpush.bf16.msra.mxu0 0
      %342 = vmatpush.bf16.msra.mxu0 0
      %343 = vmatpush.bf16.msra.mxu0 0
      %344 = vmatpush.bf16.msra.mxu0 0
      %345 = vmatpush.bf16.msra.mxu0 0
      %346 = vmatpush.bf16.msra.mxu0 0
      %347 = vmatpush.bf16.msra.mxu0 0
      %348 = vmatpush.bf16.msra.mxu0 %v339
      %349 = vmatmul.bf16.gmra.mxu0 %v335
      %v350 = vpop.f32.mrf.mxu0
      %v351 = vadd.f32 0.0, %v350
      %v352 = vpop.f32.mrf.mxu0
      %353 = vdwg.mxu0
      %vm354 = vcmask 64512
      %v356 = vsel %vm354, %v317, 0
      %vm358 = vcmask 1043456
      %v360 = vsel %vm358, %v319, 0
      %362 = vmatpush.bf16.msra.mxu0 0
      %363 = vmatpush.bf16.msra.mxu0 0
      %364 = vmatpush.bf16.msra.mxu0 0
      %365 = vmatpush.bf16.msra.mxu0 0
      %366 = vmatpush.bf16.msra.mxu0 0
      %367 = vmatpush.bf16.msra.mxu0 0
      %368 = vmatpush.bf16.msra.mxu0 0
      %369 = vmatpush.bf16.msra.mxu0 %v360
      %370 = vmatmul.bf16.gmra.mxu0 %v356
      %v371 = vpop.f32.mrf.mxu0
      %v372 = vadd.f32 %v351, %v371
      %v373 = vpop.f32.mrf.mxu0
      %374 = vdwg.mxu0
      %s375 = scalar_lea.vmem %s290, 8
      %v376 = vld [vmem:[%s375] sm:$0xf]
      %v377 = vld [vmem:[%s375 + $0x4] sm:$0x1]
      %s378 = scalar_lea.vmem %s2, 4
      %v379 = vld [vmem:[%s378] sm:$0xf]
      %v381 = vsel %vm354, %v376, 0
      %v384 = vsel %vm358, %v379, 0
      %386 = vmatpush.bf16.msra.mxu0 0
      %387 = vmatpush.bf16.msra.mxu0 0
      %388 = vmatpush.bf16.msra.mxu0 0
      %389 = vmatpush.bf16.msra.mxu0 0
      %390 = vmatpush.bf16.msra.mxu0 0
      %391 = vmatpush.bf16.msra.mxu0 0
      %392 = vmatpush.bf16.msra.mxu0 0
      %393 = vmatpush.bf16.msra.mxu0 %v384
      %394 = vmatmul.bf16.gmra.mxu0 %v381
      %v395 = vpop.f32.mrf.mxu0
      %v396 = vadd.f32 0.0, %v395
      %v397 = vpop.f32.mrf.mxu0
      %398 = vdwg.mxu0
      %v399 = vadd.f32 %v372, %v396
      %s400 = scalar_lea.vmem %s3, 2
      %v401 = vld [vmem:[%s400] sm:$0x3]
      %v404 = vunpack.c.l.b16 %v376
      %v405 = vunpack.c.l.b16 %v377
      %v406 = vpack.c.b16 %v405, %v404
      %v408 = vshrl.u32 %v406, 16
      %v410 = vshll.u32 %v406, 16
      %v412 = vrot.slane %v410, 1
      %v413 = vor.u32 %v408, %v412
      %v415 = vsel %vm333, %v413, 0
      %v418 = vsel %vm337, %v401, 0
      %420 = vmatpush.bf16.msra.mxu0 0
      %421 = vmatpush.bf16.msra.mxu0 0
      %422 = vmatpush.bf16.msra.mxu0 0
      %423 = vmatpush.bf16.msra.mxu0 0
      %424 = vmatpush.bf16.msra.mxu0 0
      %425 = vmatpush.bf16.msra.mxu0 0
      %426 = vmatpush.bf16.msra.mxu0 0
      %427 = vmatpush.bf16.msra.mxu0 %v418
      %428 = vmatmul.bf16.gmra.mxu0 %v415
      %v429 = vpop.f32.mrf.mxu0
      %v430 = vadd.f32 0.0, %v429
      %v431 = vpop.f32.mrf.mxu0
      %432 = vdwg.mxu0
      %v433 = vadd.f32 %v399, %v430
      %s434 = scalar_lea.vmem %s290, 16
      %v435 = vld [vmem:[%s434] sm:$0xf]
      %v436 = vld [vmem:[%s434 + $0x4] sm:$0x1]
      %s437 = scalar_lea.vmem %s2, 8
      %v438 = vld [vmem:[%s437] sm:$0xf]
      %v440 = vsel %vm354, %v435, 0
      %v443 = vsel %vm358, %v438, 0
      %445 = vmatpush.bf16.msra.mxu0 0
      %446 = vmatpush.bf16.msra.mxu0 0
      %447 = vmatpush.bf16.msra.mxu0 0
      %448 = vmatpush.bf16.msra.mxu0 0
      %449 = vmatpush.bf16.msra.mxu0 0
      %450 = vmatpush.bf16.msra.mxu0 0
      %451 = vmatpush.bf16.msra.mxu0 0
      %452 = vmatpush.bf16.msra.mxu0 %v443
      %453 = vmatmul.bf16.gmra.mxu0 %v440
      %v454 = vpop.f32.mrf.mxu0
      %v455 = vadd.f32 0.0, %v454
      %v456 = vpop.f32.mrf.mxu0
      %457 = vdwg.mxu0
      %v458 = vadd.f32 %v433, %v455
      %s459 = scalar_lea.vmem %s3, 4
      %v460 = vld [vmem:[%s459] sm:$0x3]
      %v463 = vunpack.c.l.b16 %v435
      %v464 = vunpack.c.l.b16 %v436
      %v465 = vpack.c.b16 %v464, %v463
      %v467 = vshrl.u32 %v465, 16
      %v469 = vshll.u32 %v465, 16
      %v471 = vrot.slane %v469, 1
      %v472 = vor.u32 %v467, %v471
      %v474 = vsel %vm333, %v472, 0
      %v477 = vsel %vm337, %v460, 0
      %479 = vmatpush.bf16.msra.mxu0 0
      %480 = vmatpush.bf16.msra.mxu0 0
      %481 = vmatpush.bf16.msra.mxu0 0
      %482 = vmatpush.bf16.msra.mxu0 0
      %483 = vmatpush.bf16.msra.mxu0 0
      %484 = vmatpush.bf16.msra.mxu0 0
      %485 = vmatpush.bf16.msra.mxu0 0
      %486 = vmatpush.bf16.msra.mxu0 %v477
      %487 = vmatmul.bf16.gmra.mxu0 %v474
      %v488 = vpop.f32.mrf.mxu0
      %v489 = vadd.f32 0.0, %v488
      %v490 = vpop.f32.mrf.mxu0
      %491 = vdwg.mxu0
      %v492 = vadd.f32 %v458, %v489
      %v494 = vperm.slane %v316, 0
      %v496 = vadd.f32 %v492, %v494
      %v497 = vmul.f32 %v496, 0.1
      %v498 = vmax.f32 %v496, %v497
      %v499 = vpack.c.bf16 %v498, %v498
      %500 = vst [vmem:[%s313] sm:$0xf] %v499
      %v501 = vld [vmem:[%s434] sm:$0xf]
      %v502 = vld [vmem:[%s434 + $0x4] sm:$0x1]
      %v503 = vld [vmem:[%s2] sm:$0xf]
      %v504 = vld [vmem:[%s3] sm:$0x3]
      %v507 = vunpack.c.l.b16 %v501
      %v508 = vunpack.c.l.b16 %v502
      %v509 = vpack.c.b16 %v508, %v507
      %v511 = vshrl.u32 %v509, 16
      %v513 = vshll.u32 %v509, 16
      %v515 = vrot.slane %v513, 1
      %v516 = vor.u32 %v511, %v515
      %v518 = vsel %vm333, %v516, 0
      %v521 = vsel %vm337, %v504, 0
      %523 = vmatpush.bf16.msra.mxu0 0
      %524 = vmatpush.bf16.msra.mxu0 0
      %525 = vmatpush.bf16.msra.mxu0 0
      %526 = vmatpush.bf16.msra.mxu0 0
      %527 = vmatpush.bf16.msra.mxu0 0
      %528 = vmatpush.bf16.msra.mxu0 0
      %529 = vmatpush.bf16.msra.mxu0 0
      %530 = vmatpush.bf16.msra.mxu0 %v521
      %531 = vmatmul.bf16.gmra.mxu0 %v518
      %v532 = vpop.f32.mrf.mxu0
      %v533 = vadd.f32 0.0, %v532
      %v534 = vpop.f32.mrf.mxu0
      %535 = vdwg.mxu0
      %v537 = vsel %vm354, %v501, 0
      %v540 = vsel %vm358, %v503, 0
      %542 = vmatpush.bf16.msra.mxu0 0
      %543 = vmatpush.bf16.msra.mxu0 0
      %544 = vmatpush.bf16.msra.mxu0 0
      %545 = vmatpush.bf16.msra.mxu0 0
      %546 = vmatpush.bf16.msra.mxu0 0
      %547 = vmatpush.bf16.msra.mxu0 0
      %548 = vmatpush.bf16.msra.mxu0 0
      %549 = vmatpush.bf16.msra.mxu0 %v540
      %550 = vmatmul.bf16.gmra.mxu0 %v537
      %v551 = vpop.f32.mrf.mxu0
      %v552 = vadd.f32 %v533, %v551
      %v553 = vpop.f32.mrf.mxu0
      %554 = vdwg.mxu0
      %s555 = scalar_lea.vmem %s290, 24
      %v556 = vld [vmem:[%s555] sm:$0xf]
      %v557 = vld [vmem:[%s555 + $0x4] sm:$0x1]
      %v558 = vld [vmem:[%s378] sm:$0xf]
      %v560 = vsel %vm354, %v556, 0
      %v563 = vsel %vm358, %v558, 0
      %565 = vmatpush.bf16.msra.mxu0 0
      %566 = vmatpush.bf16.msra.mxu0 0
      %567 = vmatpush.bf16.msra.mxu0 0
      %568 = vmatpush.bf16.msra.mxu0 0
      %569 = vmatpush.bf16.msra.mxu0 0
      %570 = vmatpush.bf16.msra.mxu0 0
      %571 = vmatpush.bf16.msra.mxu0 0
      %572 = vmatpush.bf16.msra.mxu0 %v563
      %573 = vmatmul.bf16.gmra.mxu0 %v560
      %v574 = vpop.f32.mrf.mxu0
      %v575 = vadd.f32 0.0, %v574
      %v576 = vpop.f32.mrf.mxu0
      %577 = vdwg.mxu0
      %v578 = vadd.f32 %v552, %v575
      %v579 = vld [vmem:[%s400] sm:$0x3]
      %v582 = vunpack.c.l.b16 %v556
      %v583 = vunpack.c.l.b16 %v557
      %v584 = vpack.c.b16 %v583, %v582
      %v586 = vshrl.u32 %v584, 16
      %v588 = vshll.u32 %v584, 16
      %v590 = vrot.slane %v588, 1
      %v591 = vor.u32 %v586, %v590
      %v593 = vsel %vm333, %v591, 0
      %v596 = vsel %vm337, %v579, 0
      %598 = vmatpush.bf16.msra.mxu0 0
      %599 = vmatpush.bf16.msra.mxu0 0
      %600 = vmatpush.bf16.msra.mxu0 0
      %601 = vmatpush.bf16.msra.mxu0 0
      %602 = vmatpush.bf16.msra.mxu0 0
      %603 = vmatpush.bf16.msra.mxu0 0
      %604 = vmatpush.bf16.msra.mxu0 0
      %605 = vmatpush.bf16.msra.mxu0 %v596
      %606 = vmatmul.bf16.gmra.mxu0 %v593
      %v607 = vpop.f32.mrf.mxu0
      %v608 = vadd.f32 0.0, %v607
      %v609 = vpop.f32.mrf.mxu0
      %610 = vdwg.mxu0
      %v611 = vadd.f32 %v578, %v608
      %s612 = scalar_lea.vmem %s290, 32
      %v613 = vld [vmem:[%s612] sm:$0xf]
      %v614 = vld [vmem:[%s612 + $0x4] sm:$0x1]
      %v615 = vld [vmem:[%s437] sm:$0xf]
      %v617 = vsel %vm354, %v613, 0
      %v620 = vsel %vm358, %v615, 0
      %622 = vmatpush.bf16.msra.mxu0 0
      %623 = vmatpush.bf16.msra.mxu0 0
      %624 = vmatpush.bf16.msra.mxu0 0
      %625 = vmatpush.bf16.msra.mxu0 0
      %626 = vmatpush.bf16.msra.mxu0 0
      %627 = vmatpush.bf16.msra.mxu0 0
      %628 = vmatpush.bf16.msra.mxu0 0
      %629 = vmatpush.bf16.msra.mxu0 %v620
      %630 = vmatmul.bf16.gmra.mxu0 %v617
      %v631 = vpop.f32.mrf.mxu0
      %v632 = vadd.f32 0.0, %v631
      %v633 = vpop.f32.mrf.mxu0
      %634 = vdwg.mxu0
      %v635 = vadd.f32 %v611, %v632
      %v636 = vld [vmem:[%s459] sm:$0x3]
      %v639 = vunpack.c.l.b16 %v613
      %v640 = vunpack.c.l.b16 %v614
      %v641 = vpack.c.b16 %v640, %v639
      %v643 = vshrl.u32 %v641, 16
      %v645 = vshll.u32 %v641, 16
      %v647 = vrot.slane %v645, 1
      %v648 = vor.u32 %v643, %v647
      %v650 = vsel %vm333, %v648, 0
      %v653 = vsel %vm337, %v636, 0
      %655 = vmatpush.bf16.msra.mxu0 0
      %656 = vmatpush.bf16.msra.mxu0 0
      %657 = vmatpush.bf16.msra.mxu0 0
      %658 = vmatpush.bf16.msra.mxu0 0
      %659 = vmatpush.bf16.msra.mxu0 0
      %660 = vmatpush.bf16.msra.mxu0 0
      %661 = vmatpush.bf16.msra.mxu0 0
      %662 = vmatpush.bf16.msra.mxu0 %v653
      %663 = vmatmul.bf16.gmra.mxu0 %v650
      %v664 = vpop.f32.mrf.mxu0
      %v665 = vadd.f32 0.0, %v664
      %v666 = vpop.f32.mrf.mxu0
      %667 = vdwg.mxu0
      %v668 = vadd.f32 %v635, %v665
      %v669 = vadd.f32 %v668, %v494
      %v670 = vmul.f32 %v669, 0.1
      %v671 = vmax.f32 %v669, %v670
      %v672 = vpack.c.bf16 %v671, %v671
      %s673 = scalar_lea.vmem %s313, 4
      %674 = vst [vmem:[%s673] sm:$0xf] %v672
      %v675 = vld [vmem:[%s612] sm:$0xf]
      %v676 = vld [vmem:[%s612 + $0x4] sm:$0x1]
      %v677 = vld [vmem:[%s2] sm:$0xf]
      %v678 = vld [vmem:[%s3] sm:$0x3]
      %v681 = vunpack.c.l.b16 %v675
      %v682 = vunpack.c.l.b16 %v676
      %v683 = vpack.c.b16 %v682, %v681
      %v685 = vshrl.u32 %v683, 16
      %v687 = vshll.u32 %v683, 16
      %v689 = vrot.slane %v687, 1
      %v690 = vor.u32 %v685, %v689
      %v692 = vsel %vm333, %v690, 0
      %v695 = vsel %vm337, %v678, 0
      %697 = vmatpush.bf16.msra.mxu0 0
      %698 = vmatpush.bf16.msra.mxu0 0
      %699 = vmatpush.bf16.msra.mxu0 0
      %700 = vmatpush.bf16.msra.mxu0 0
      %701 = vmatpush.bf16.msra.mxu0 0
      %702 = vmatpush.bf16.msra.mxu0 0
      %703 = vmatpush.bf16.msra.mxu0 0
      %704 = vmatpush.bf16.msra.mxu0 %v695
      %705 = vmatmul.bf16.gmra.mxu0 %v692
      %v706 = vpop.f32.mrf.mxu0
      %v707 = vadd.f32 0.0, %v706
      %v708 = vpop.f32.mrf.mxu0
      %709 = vdwg.mxu0
      %v711 = vsel %vm354, %v675, 0
      %v714 = vsel %vm358, %v677, 0
      %716 = vmatpush.bf16.msra.mxu0 0
      %717 = vmatpush.bf16.msra.mxu0 0
      %718 = vmatpush.bf16.msra.mxu0 0
      %719 = vmatpush.bf16.msra.mxu0 0
      %720 = vmatpush.bf16.msra.mxu0 0
      %721 = vmatpush.bf16.msra.mxu0 0
      %722 = vmatpush.bf16.msra.mxu0 0
      %723 = vmatpush.bf16.msra.mxu0 %v714
      %724 = vmatmul.bf16.gmra.mxu0 %v711
      %v725 = vpop.f32.mrf.mxu0
      %v726 = vadd.f32 %v707, %v725
      %v727 = vpop.f32.mrf.mxu0
      %728 = vdwg.mxu0
      %s729 = scalar_lea.vmem %s290, 40
      %v730 = vld [vmem:[%s729] sm:$0xf]
      %v731 = vld [vmem:[%s729 + $0x4] sm:$0x1]
      %v732 = vld [vmem:[%s378] sm:$0xf]
      %v734 = vsel %vm354, %v730, 0
      %v737 = vsel %vm358, %v732, 0
      %739 = vmatpush.bf16.msra.mxu0 0
      %740 = vmatpush.bf16.msra.mxu0 0
      %741 = vmatpush.bf16.msra.mxu0 0
      %742 = vmatpush.bf16.msra.mxu0 0
      %743 = vmatpush.bf16.msra.mxu0 0
      %744 = vmatpush.bf16.msra.mxu0 0
      %745 = vmatpush.bf16.msra.mxu0 0
      %746 = vmatpush.bf16.msra.mxu0 %v737
      %747 = vmatmul.bf16.gmra.mxu0 %v734
      %v748 = vpop.f32.mrf.mxu0
      %v749 = vadd.f32 0.0, %v748
      %v750 = vpop.f32.mrf.mxu0
      %751 = vdwg.mxu0
      %v752 = vadd.f32 %v726, %v749
      %v753 = vld [vmem:[%s400] sm:$0x3]
      %v756 = vunpack.c.l.b16 %v730
      %v757 = vunpack.c.l.b16 %v731
      %v758 = vpack.c.b16 %v757, %v756
      %v760 = vshrl.u32 %v758, 16
      %v762 = vshll.u32 %v758, 16
      %v764 = vrot.slane %v762, 1
      %v765 = vor.u32 %v760, %v764
      %v767 = vsel %vm333, %v765, 0
      %v770 = vsel %vm337, %v753, 0
      %772 = vmatpush.bf16.msra.mxu0 0
      %773 = vmatpush.bf16.msra.mxu0 0
      %774 = vmatpush.bf16.msra.mxu0 0
      %775 = vmatpush.bf16.msra.mxu0 0
      %776 = vmatpush.bf16.msra.mxu0 0
      %777 = vmatpush.bf16.msra.mxu0 0
      %778 = vmatpush.bf16.msra.mxu0 0
      %779 = vmatpush.bf16.msra.mxu0 %v770
      %780 = vmatmul.bf16.gmra.mxu0 %v767
      %v781 = vpop.f32.mrf.mxu0
      %v782 = vadd.f32 0.0, %v781
      %v783 = vpop.f32.mrf.mxu0
      %784 = vdwg.mxu0
      %v785 = vadd.f32 %v752, %v782
      %s786 = scalar_lea.vmem %s290, 48
      %v787 = vld [vmem:[%s786] sm:$0xf]
      %v788 = vld [vmem:[%s786 + $0x4] sm:$0x1]
      %v789 = vld [vmem:[%s437] sm:$0xf]
      %v791 = vsel %vm354, %v787, 0
      %v794 = vsel %vm358, %v789, 0
      %796 = vmatpush.bf16.msra.mxu0 0
      %797 = vmatpush.bf16.msra.mxu0 0
      %798 = vmatpush.bf16.msra.mxu0 0
      %799 = vmatpush.bf16.msra.mxu0 0
      %800 = vmatpush.bf16.msra.mxu0 0
      %801 = vmatpush.bf16.msra.mxu0 0
      %802 = vmatpush.bf16.msra.mxu0 0
      %803 = vmatpush.bf16.msra.mxu0 %v794
      %804 = vmatmul.bf16.gmra.mxu0 %v791
      %v805 = vpop.f32.mrf.mxu0
      %v806 = vadd.f32 0.0, %v805
      %v807 = vpop.f32.mrf.mxu0
      %808 = vdwg.mxu0
      %v809 = vadd.f32 %v785, %v806
      %v810 = vld [vmem:[%s459] sm:$0x3]
      %v813 = vunpack.c.l.b16 %v787
      %v814 = vunpack.c.l.b16 %v788
      %v815 = vpack.c.b16 %v814, %v813
      %v817 = vshrl.u32 %v815, 16
      %v819 = vshll.u32 %v815, 16
      %v821 = vrot.slane %v819, 1
      %v822 = vor.u32 %v817, %v821
      %v824 = vsel %vm333, %v822, 0
      %v827 = vsel %vm337, %v810, 0
      %829 = vmatpush.bf16.msra.mxu0 0
      %830 = vmatpush.bf16.msra.mxu0 0
      %831 = vmatpush.bf16.msra.mxu0 0
      %832 = vmatpush.bf16.msra.mxu0 0
      %833 = vmatpush.bf16.msra.mxu0 0
      %834 = vmatpush.bf16.msra.mxu0 0
      %835 = vmatpush.bf16.msra.mxu0 0
      %836 = vmatpush.bf16.msra.mxu0 %v827
      %837 = vmatmul.bf16.gmra.mxu0 %v824
      %v838 = vpop.f32.mrf.mxu0
      %v839 = vadd.f32 0.0, %v838
      %v840 = vpop.f32.mrf.mxu0
      %841 = vdwg.mxu0
      %v842 = vadd.f32 %v809, %v839
      %v843 = vadd.f32 %v842, %v494
      %v844 = vmul.f32 %v843, 0.1
      %v845 = vmax.f32 %v843, %v844
      %v846 = vpack.c.bf16 %v845, %v845
      %s847 = scalar_lea.vmem %s313, 8
      %848 = vst [vmem:[%s847] sm:$0xf] %v846
      %v849 = vld [vmem:[%s786] sm:$0xf]
      %v850 = vld [vmem:[%s786 + $0x4] sm:$0x1]
      %v851 = vld [vmem:[%s2] sm:$0xf]
      %v852 = vld [vmem:[%s3] sm:$0x3]
      %v855 = vunpack.c.l.b16 %v849
      %v856 = vunpack.c.l.b16 %v850
      %v857 = vpack.c.b16 %v856, %v855
      %v859 = vshrl.u32 %v857, 16
      %v861 = vshll.u32 %v857, 16
      %v863 = vrot.slane %v861, 1
      %v864 = vor.u32 %v859, %v863
      %v866 = vsel %vm333, %v864, 0
      %v869 = vsel %vm337, %v852, 0
      %871 = vmatpush.bf16.msra.mxu0 0
      %872 = vmatpush.bf16.msra.mxu0 0
      %873 = vmatpush.bf16.msra.mxu0 0
      %874 = vmatpush.bf16.msra.mxu0 0
      %875 = vmatpush.bf16.msra.mxu0 0
      %876 = vmatpush.bf16.msra.mxu0 0
      %877 = vmatpush.bf16.msra.mxu0 0
      %878 = vmatpush.bf16.msra.mxu0 %v869
      %879 = vmatmul.bf16.gmra.mxu0 %v866
      %v880 = vpop.f32.mrf.mxu0
      %v881 = vadd.f32 0.0, %v880
      %v882 = vpop.f32.mrf.mxu0
      %883 = vdwg.mxu0
      %v885 = vsel %vm354, %v849, 0
      %v888 = vsel %vm358, %v851, 0
      %890 = vmatpush.bf16.msra.mxu0 0
      %891 = vmatpush.bf16.msra.mxu0 0
      %892 = vmatpush.bf16.msra.mxu0 0
      %893 = vmatpush.bf16.msra.mxu0 0
      %894 = vmatpush.bf16.msra.mxu0 0
      %895 = vmatpush.bf16.msra.mxu0 0
      %896 = vmatpush.bf16.msra.mxu0 0
      %897 = vmatpush.bf16.msra.mxu0 %v888
      %898 = vmatmul.bf16.gmra.mxu0 %v885
      %v899 = vpop.f32.mrf.mxu0
      %v900 = vadd.f32 %v881, %v899
      %v901 = vpop.f32.mrf.mxu0
      %902 = vdwg.mxu0
      %s903 = scalar_lea.vmem %s290, 56
      %v904 = vld [vmem:[%s903] sm:$0xf]
      %v905 = vld [vmem:[%s903 + $0x4] sm:$0x1]
      %v906 = vld [vmem:[%s378] sm:$0xf]
      %v908 = vsel %vm354, %v904, 0
      %v911 = vsel %vm358, %v906, 0
      %913 = vmatpush.bf16.msra.mxu0 0
      %914 = vmatpush.bf16.msra.mxu0 0
      %915 = vmatpush.bf16.msra.mxu0 0
      %916 = vmatpush.bf16.msra.mxu0 0
      %917 = vmatpush.bf16.msra.mxu0 0
      %918 = vmatpush.bf16.msra.mxu0 0
      %919 = vmatpush.bf16.msra.mxu0 0
      %920 = vmatpush.bf16.msra.mxu0 %v911
      %921 = vmatmul.bf16.gmra.mxu0 %v908
      %v922 = vpop.f32.mrf.mxu0
      %v923 = vadd.f32 0.0, %v922
      %v924 = vpop.f32.mrf.mxu0
      %925 = vdwg.mxu0
      %v926 = vadd.f32 %v900, %v923
      %v927 = vld [vmem:[%s400] sm:$0x3]
      %v930 = vunpack.c.l.b16 %v904
      %v931 = vunpack.c.l.b16 %v905
      %v932 = vpack.c.b16 %v931, %v930
      %v934 = vshrl.u32 %v932, 16
      %v936 = vshll.u32 %v932, 16
      %v938 = vrot.slane %v936, 1
      %v939 = vor.u32 %v934, %v938
      %v941 = vsel %vm333, %v939, 0
      %v944 = vsel %vm337, %v927, 0
      %946 = vmatpush.bf16.msra.mxu0 0
      %947 = vmatpush.bf16.msra.mxu0 0
      %948 = vmatpush.bf16.msra.mxu0 0
      %949 = vmatpush.bf16.msra.mxu0 0
      %950 = vmatpush.bf16.msra.mxu0 0
      %951 = vmatpush.bf16.msra.mxu0 0
      %952 = vmatpush.bf16.msra.mxu0 0
      %953 = vmatpush.bf16.msra.mxu0 %v944
      %954 = vmatmul.bf16.gmra.mxu0 %v941
      %v955 = vpop.f32.mrf.mxu0
      %v956 = vadd.f32 0.0, %v955
      %v957 = vpop.f32.mrf.mxu0
      %958 = vdwg.mxu0
      %v959 = vadd.f32 %v926, %v956
      %s960 = scalar_lea.vmem %s290, 64
      %v961 = vld [vmem:[%s960] sm:$0xf]
      %v962 = vld [vmem:[%s960 + $0x4] sm:$0x1]
      %v963 = vld [vmem:[%s437] sm:$0xf]
      %v965 = vsel %vm354, %v961, 0
      %v968 = vsel %vm358, %v963, 0
      %970 = vmatpush.bf16.msra.mxu0 0
      %971 = vmatpush.bf16.msra.mxu0 0
      %972 = vmatpush.bf16.msra.mxu0 0
      %973 = vmatpush.bf16.msra.mxu0 0
      %974 = vmatpush.bf16.msra.mxu0 0
      %975 = vmatpush.bf16.msra.mxu0 0
      %976 = vmatpush.bf16.msra.mxu0 0
      %977 = vmatpush.bf16.msra.mxu0 %v968
      %978 = vmatmul.bf16.gmra.mxu0 %v965
      %v979 = vpop.f32.mrf.mxu0
      %v980 = vadd.f32 0.0, %v979
      %v981 = vpop.f32.mrf.mxu0
      %982 = vdwg.mxu0
      %v983 = vadd.f32 %v959, %v980
      %v984 = vld [vmem:[%s459] sm:$0x3]
      %v987 = vunpack.c.l.b16 %v961
      %v988 = vunpack.c.l.b16 %v962
      %v989 = vpack.c.b16 %v988, %v987
      %v991 = vshrl.u32 %v989, 16
      %v993 = vshll.u32 %v989, 16
      %v995 = vrot.slane %v993, 1
      %v996 = vor.u32 %v991, %v995
      %v998 = vsel %vm333, %v996, 0
      %v1001 = vsel %vm337, %v984, 0
      %1003 = vmatpush.bf16.msra.mxu0 0
      %1004 = vmatpush.bf16.msra.mxu0 0
      %1005 = vmatpush.bf16.msra.mxu0 0
      %1006 = vmatpush.bf16.msra.mxu0 0
      %1007 = vmatpush.bf16.msra.mxu0 0
      %1008 = vmatpush.bf16.msra.mxu0 0
      %1009 = vmatpush.bf16.msra.mxu0 0
      %1010 = vmatpush.bf16.msra.mxu0 %v1001
      %1011 = vmatmul.bf16.gmra.mxu0 %v998
      %v1012 = vpop.f32.mrf.mxu0
      %v1013 = vadd.f32 0.0, %v1012
      %v1014 = vpop.f32.mrf.mxu0
      %1015 = vdwg.mxu0
      %v1016 = vadd.f32 %v983, %v1013
      %v1017 = vadd.f32 %v1016, %v494
      %v1018 = vmul.f32 %v1017, 0.1
      %v1019 = vmax.f32 %v1017, %v1018
      %v1020 = vpack.c.bf16 %v1019, %v1019
      %s1021 = scalar_lea.vmem %s313, 12
      %1022 = vst [vmem:[%s1021] sm:$0xf] %v1020
      %v1023 = vld [vmem:[%s960] sm:$0xf]
      %v1024 = vld [vmem:[%s960 + $0x4] sm:$0x1]
      %v1025 = vld [vmem:[%s2] sm:$0xf]
      %v1026 = vld [vmem:[%s3] sm:$0x3]
      %v1029 = vunpack.c.l.b16 %v1023
      %v1030 = vunpack.c.l.b16 %v1024
      %v1031 = vpack.c.b16 %v1030, %v1029
      %v1033 = vshrl.u32 %v1031, 16
      %v1035 = vshll.u32 %v1031, 16
      %v1037 = vrot.slane %v1035, 1
      %v1038 = vor.u32 %v1033, %v1037
      %v1040 = vsel %vm333, %v1038, 0
      %v1043 = vsel %vm337, %v1026, 0
      %1045 = vmatpush.bf16.msra.mxu0 0
      %1046 = vmatpush.bf16.msra.mxu0 0
      %1047 = vmatpush.bf16.msra.mxu0 0
      %1048 = vmatpush.bf16.msra.mxu0 0
      %1049 = vmatpush.bf16.msra.mxu0 0
      %1050 = vmatpush.bf16.msra.mxu0 0
      %1051 = vmatpush.bf16.msra.mxu0 0
      %1052 = vmatpush.bf16.msra.mxu0 %v1043
      %1053 = vmatmul.bf16.gmra.mxu0 %v1040
      %v1054 = vpop.f32.mrf.mxu0
      %v1055 = vadd.f32 0.0, %v1054
      %v1056 = vpop.f32.mrf.mxu0
      %1057 = vdwg.mxu0
      %v1059 = vsel %vm354, %v1023, 0
      %v1062 = vsel %vm358, %v1025, 0
      %1064 = vmatpush.bf16.msra.mxu0 0
      %1065 = vmatpush.bf16.msra.mxu0 0
      %1066 = vmatpush.bf16.msra.mxu0 0
      %1067 = vmatpush.bf16.msra.mxu0 0
      %1068 = vmatpush.bf16.msra.mxu0 0
      %1069 = vmatpush.bf16.msra.mxu0 0
      %1070 = vmatpush.bf16.msra.mxu0 0
      %1071 = vmatpush.bf16.msra.mxu0 %v1062
      %1072 = vmatmul.bf16.gmra.mxu0 %v1059
      %v1073 = vpop.f32.mrf.mxu0
      %v1074 = vadd.f32 %v1055, %v1073
      %v1075 = vpop.f32.mrf.mxu0
      %1076 = vdwg.mxu0
      %s1077 = scalar_lea.vmem %s290, 72
      %v1078 = vld [vmem:[%s1077] sm:$0xf]
      %v1079 = vld [vmem:[%s1077 + $0x4] sm:$0x1]
      %v1080 = vld [vmem:[%s378] sm:$0xf]
      %v1082 = vsel %vm354, %v1078, 0
      %v1085 = vsel %vm358, %v1080, 0
      %1087 = vmatpush.bf16.msra.mxu0 0
      %1088 = vmatpush.bf16.msra.mxu0 0
      %1089 = vmatpush.bf16.msra.mxu0 0
      %1090 = vmatpush.bf16.msra.mxu0 0
      %1091 = vmatpush.bf16.msra.mxu0 0
      %1092 = vmatpush.bf16.msra.mxu0 0
      %1093 = vmatpush.bf16.msra.mxu0 0
      %1094 = vmatpush.bf16.msra.mxu0 %v1085
      %1095 = vmatmul.bf16.gmra.mxu0 %v1082
      %v1096 = vpop.f32.mrf.mxu0
      %v1097 = vadd.f32 0.0, %v1096
      %v1098 = vpop.f32.mrf.mxu0
      %1099 = vdwg.mxu0
      %v1100 = vadd.f32 %v1074, %v1097
      %v1101 = vld [vmem:[%s400] sm:$0x3]
      %v1104 = vunpack.c.l.b16 %v1078
      %v1105 = vunpack.c.l.b16 %v1079
      %v1106 = vpack.c.b16 %v1105, %v1104
      %v1108 = vshrl.u32 %v1106, 16
      %v1110 = vshll.u32 %v1106, 16
      %v1112 = vrot.slane %v1110, 1
      %v1113 = vor.u32 %v1108, %v1112
      %v1115 = vsel %vm333, %v1113, 0
      %v1118 = vsel %vm337, %v1101, 0
      %1120 = vmatpush.bf16.msra.mxu0 0
      %1121 = vmatpush.bf16.msra.mxu0 0
      %1122 = vmatpush.bf16.msra.mxu0 0
      %1123 = vmatpush.bf16.msra.mxu0 0
      %1124 = vmatpush.bf16.msra.mxu0 0
      %1125 = vmatpush.bf16.msra.mxu0 0
      %1126 = vmatpush.bf16.msra.mxu0 0
      %1127 = vmatpush.bf16.msra.mxu0 %v1118
      %1128 = vmatmul.bf16.gmra.mxu0 %v1115
      %v1129 = vpop.f32.mrf.mxu0
      %v1130 = vadd.f32 0.0, %v1129
      %v1131 = vpop.f32.mrf.mxu0
      %1132 = vdwg.mxu0
      %v1133 = vadd.f32 %v1100, %v1130
      %s1134 = scalar_lea.vmem %s290, 80
      %v1135 = vld [vmem:[%s1134] sm:$0xf]
      %v1136 = vld [vmem:[%s1134 + $0x4] sm:$0x1]
      %v1137 = vld [vmem:[%s437] sm:$0xf]
      %v1139 = vsel %vm354, %v1135, 0
      %v1142 = vsel %vm358, %v1137, 0
      %1144 = vmatpush.bf16.msra.mxu0 0
      %1145 = vmatpush.bf16.msra.mxu0 0
      %1146 = vmatpush.bf16.msra.mxu0 0
      %1147 = vmatpush.bf16.msra.mxu0 0
      %1148 = vmatpush.bf16.msra.mxu0 0
      %1149 = vmatpush.bf16.msra.mxu0 0
      %1150 = vmatpush.bf16.msra.mxu0 0
      %1151 = vmatpush.bf16.msra.mxu0 %v1142
      %1152 = vmatmul.bf16.gmra.mxu0 %v1139
      %v1153 = vpop.f32.mrf.mxu0
      %v1154 = vadd.f32 0.0, %v1153
      %v1155 = vpop.f32.mrf.mxu0
      %1156 = vdwg.mxu0
      %v1157 = vadd.f32 %v1133, %v1154
      %v1158 = vld [vmem:[%s459] sm:$0x3]
      %v1161 = vunpack.c.l.b16 %v1135
      %v1162 = vunpack.c.l.b16 %v1136
      %v1163 = vpack.c.b16 %v1162, %v1161
      %v1165 = vshrl.u32 %v1163, 16
      %v1167 = vshll.u32 %v1163, 16
      %v1169 = vrot.slane %v1167, 1
      %v1170 = vor.u32 %v1165, %v1169
      %v1172 = vsel %vm333, %v1170, 0
      %v1175 = vsel %vm337, %v1158, 0
      %1177 = vmatpush.bf16.msra.mxu0 0
      %1178 = vmatpush.bf16.msra.mxu0 0
      %1179 = vmatpush.bf16.msra.mxu0 0
      %1180 = vmatpush.bf16.msra.mxu0 0
      %1181 = vmatpush.bf16.msra.mxu0 0
      %1182 = vmatpush.bf16.msra.mxu0 0
      %1183 = vmatpush.bf16.msra.mxu0 0
      %1184 = vmatpush.bf16.msra.mxu0 %v1175
      %1185 = vmatmul.bf16.gmra.mxu0 %v1172
      %v1186 = vpop.f32.mrf.mxu0
      %v1187 = vadd.f32 0.0, %v1186
      %v1188 = vpop.f32.mrf.mxu0
      %1189 = vdwg.mxu0
      %v1190 = vadd.f32 %v1157, %v1187
      %v1191 = vadd.f32 %v1190, %v494
      %v1192 = vmul.f32 %v1191, 0.1
      %v1193 = vmax.f32 %v1191, %v1192
      %v1194 = vpack.c.bf16 %v1193, %v1193
      %s1195 = scalar_lea.vmem %s313, 16
      %1196 = vst [vmem:[%s1195] sm:$0xf] %v1194
      %v1197 = vld [vmem:[%s1134] sm:$0xf]
      %v1198 = vld [vmem:[%s1134 + $0x4] sm:$0x1]
      %v1199 = vld [vmem:[%s2] sm:$0xf]
      %v1200 = vld [vmem:[%s3] sm:$0x3]
      %v1203 = vunpack.c.l.b16 %v1197
      %v1204 = vunpack.c.l.b16 %v1198
      %v1205 = vpack.c.b16 %v1204, %v1203
      %v1207 = vshrl.u32 %v1205, 16
      %v1209 = vshll.u32 %v1205, 16
      %v1211 = vrot.slane %v1209, 1
      %v1212 = vor.u32 %v1207, %v1211
      %v1214 = vsel %vm333, %v1212, 0
      %v1217 = vsel %vm337, %v1200, 0
      %1219 = vmatpush.bf16.msra.mxu0 0
      %1220 = vmatpush.bf16.msra.mxu0 0
      %1221 = vmatpush.bf16.msra.mxu0 0
      %1222 = vmatpush.bf16.msra.mxu0 0
      %1223 = vmatpush.bf16.msra.mxu0 0
      %1224 = vmatpush.bf16.msra.mxu0 0
      %1225 = vmatpush.bf16.msra.mxu0 0
      %1226 = vmatpush.bf16.msra.mxu0 %v1217
      %1227 = vmatmul.bf16.gmra.mxu0 %v1214
      %v1228 = vpop.f32.mrf.mxu0
      %v1229 = vadd.f32 0.0, %v1228
      %v1230 = vpop.f32.mrf.mxu0
      %1231 = vdwg.mxu0
      %v1233 = vsel %vm354, %v1197, 0
      %v1236 = vsel %vm358, %v1199, 0
      %1238 = vmatpush.bf16.msra.mxu0 0
      %1239 = vmatpush.bf16.msra.mxu0 0
      %1240 = vmatpush.bf16.msra.mxu0 0
      %1241 = vmatpush.bf16.msra.mxu0 0
      %1242 = vmatpush.bf16.msra.mxu0 0
      %1243 = vmatpush.bf16.msra.mxu0 0
      %1244 = vmatpush.bf16.msra.mxu0 0
      %1245 = vmatpush.bf16.msra.mxu0 %v1236
      %1246 = vmatmul.bf16.gmra.mxu0 %v1233
      %v1247 = vpop.f32.mrf.mxu0
      %v1248 = vadd.f32 %v1229, %v1247
      %v1249 = vpop.f32.mrf.mxu0
      %1250 = vdwg.mxu0
      %s1251 = scalar_lea.vmem %s290, 88
      %v1252 = vld [vmem:[%s1251] sm:$0xf]
      %v1253 = vld [vmem:[%s1251 + $0x4] sm:$0x1]
      %v1254 = vld [vmem:[%s378] sm:$0xf]
      %v1256 = vsel %vm354, %v1252, 0
      %v1259 = vsel %vm358, %v1254, 0
      %1261 = vmatpush.bf16.msra.mxu0 0
      %1262 = vmatpush.bf16.msra.mxu0 0
      %1263 = vmatpush.bf16.msra.mxu0 0
      %1264 = vmatpush.bf16.msra.mxu0 0
      %1265 = vmatpush.bf16.msra.mxu0 0
      %1266 = vmatpush.bf16.msra.mxu0 0
      %1267 = vmatpush.bf16.msra.mxu0 0
      %1268 = vmatpush.bf16.msra.mxu0 %v1259
      %1269 = vmatmul.bf16.gmra.mxu0 %v1256
      %v1270 = vpop.f32.mrf.mxu0
      %v1271 = vadd.f32 0.0, %v1270
      %v1272 = vpop.f32.mrf.mxu0
      %1273 = vdwg.mxu0
      %v1274 = vadd.f32 %v1248, %v1271
      %v1275 = vld [vmem:[%s400] sm:$0x3]
      %v1278 = vunpack.c.l.b16 %v1252
      %v1279 = vunpack.c.l.b16 %v1253
      %v1280 = vpack.c.b16 %v1279, %v1278
      %v1282 = vshrl.u32 %v1280, 16
      %v1284 = vshll.u32 %v1280, 16
      %v1286 = vrot.slane %v1284, 1
      %v1287 = vor.u32 %v1282, %v1286
      %v1289 = vsel %vm333, %v1287, 0
      %v1292 = vsel %vm337, %v1275, 0
      %1294 = vmatpush.bf16.msra.mxu0 0
      %1295 = vmatpush.bf16.msra.mxu0 0
      %1296 = vmatpush.bf16.msra.mxu0 0
      %1297 = vmatpush.bf16.msra.mxu0 0
      %1298 = vmatpush.bf16.msra.mxu0 0
      %1299 = vmatpush.bf16.msra.mxu0 0
      %1300 = vmatpush.bf16.msra.mxu0 0
      %1301 = vmatpush.bf16.msra.mxu0 %v1292
      %1302 = vmatmul.bf16.gmra.mxu0 %v1289
      %v1303 = vpop.f32.mrf.mxu0
      %v1304 = vadd.f32 0.0, %v1303
      %v1305 = vpop.f32.mrf.mxu0
      %1306 = vdwg.mxu0
      %v1307 = vadd.f32 %v1274, %v1304
      %s1308 = scalar_lea.vmem %s290, 96
      %v1309 = vld [vmem:[%s1308] sm:$0xf]
      %v1310 = vld [vmem:[%s1308 + $0x4] sm:$0x1]
      %v1311 = vld [vmem:[%s437] sm:$0xf]
      %v1313 = vsel %vm354, %v1309, 0
      %v1316 = vsel %vm358, %v1311, 0
      %1318 = vmatpush.bf16.msra.mxu0 0
      %1319 = vmatpush.bf16.msra.mxu0 0
      %1320 = vmatpush.bf16.msra.mxu0 0
      %1321 = vmatpush.bf16.msra.mxu0 0
      %1322 = vmatpush.bf16.msra.mxu0 0
      %1323 = vmatpush.bf16.msra.mxu0 0
      %1324 = vmatpush.bf16.msra.mxu0 0
      %1325 = vmatpush.bf16.msra.mxu0 %v1316
      %1326 = vmatmul.bf16.gmra.mxu0 %v1313
      %v1327 = vpop.f32.mrf.mxu0
      %v1328 = vadd.f32 0.0, %v1327
      %v1329 = vpop.f32.mrf.mxu0
      %1330 = vdwg.mxu0
      %v1331 = vadd.f32 %v1307, %v1328
      %v1332 = vld [vmem:[%s459] sm:$0x3]
      %v1335 = vunpack.c.l.b16 %v1309
      %v1336 = vunpack.c.l.b16 %v1310
      %v1337 = vpack.c.b16 %v1336, %v1335
      %v1339 = vshrl.u32 %v1337, 16
      %v1341 = vshll.u32 %v1337, 16
      %v1343 = vrot.slane %v1341, 1
      %v1344 = vor.u32 %v1339, %v1343
      %v1346 = vsel %vm333, %v1344, 0
      %v1349 = vsel %vm337, %v1332, 0
      %1351 = vmatpush.bf16.msra.mxu0 0
      %1352 = vmatpush.bf16.msra.mxu0 0
      %1353 = vmatpush.bf16.msra.mxu0 0
      %1354 = vmatpush.bf16.msra.mxu0 0
      %1355 = vmatpush.bf16.msra.mxu0 0
      %1356 = vmatpush.bf16.msra.mxu0 0
      %1357 = vmatpush.bf16.msra.mxu0 0
      %1358 = vmatpush.bf16.msra.mxu0 %v1349
      %1359 = vmatmul.bf16.gmra.mxu0 %v1346
      %v1360 = vpop.f32.mrf.mxu0
      %v1361 = vadd.f32 0.0, %v1360
      %v1362 = vpop.f32.mrf.mxu0
      %1363 = vdwg.mxu0
      %v1364 = vadd.f32 %v1331, %v1361
      %v1365 = vadd.f32 %v1364, %v494
      %v1366 = vmul.f32 %v1365, 0.1
      %v1367 = vmax.f32 %v1365, %v1366
      %v1368 = vpack.c.bf16 %v1367, %v1367
      %s1369 = scalar_lea.vmem %s313, 20
      %1370 = vst [vmem:[%s1369] sm:$0xf] %v1368
      %v1371 = vld [vmem:[%s1308] sm:$0xf]
      %v1372 = vld [vmem:[%s1308 + $0x4] sm:$0x1]
      %v1373 = vld [vmem:[%s2] sm:$0xf]
      %v1374 = vld [vmem:[%s3] sm:$0x3]
      %v1377 = vunpack.c.l.b16 %v1371
      %v1378 = vunpack.c.l.b16 %v1372
      %v1379 = vpack.c.b16 %v1378, %v1377
      %v1381 = vshrl.u32 %v1379, 16
      %v1383 = vshll.u32 %v1379, 16
      %v1385 = vrot.slane %v1383, 1
      %v1386 = vor.u32 %v1381, %v1385
      %v1388 = vsel %vm333, %v1386, 0
      %v1391 = vsel %vm337, %v1374, 0
      %1393 = vmatpush.bf16.msra.mxu0 0
      %1394 = vmatpush.bf16.msra.mxu0 0
      %1395 = vmatpush.bf16.msra.mxu0 0
      %1396 = vmatpush.bf16.msra.mxu0 0
      %1397 = vmatpush.bf16.msra.mxu0 0
      %1398 = vmatpush.bf16.msra.mxu0 0
      %1399 = vmatpush.bf16.msra.mxu0 0
      %1400 = vmatpush.bf16.msra.mxu0 %v1391
      %1401 = vmatmul.bf16.gmra.mxu0 %v1388
      %v1402 = vpop.f32.mrf.mxu0
      %v1403 = vadd.f32 0.0, %v1402
      %v1404 = vpop.f32.mrf.mxu0
      %1405 = vdwg.mxu0
      %v1407 = vsel %vm354, %v1371, 0
      %v1410 = vsel %vm358, %v1373, 0
      %1412 = vmatpush.bf16.msra.mxu0 0
      %1413 = vmatpush.bf16.msra.mxu0 0
      %1414 = vmatpush.bf16.msra.mxu0 0
      %1415 = vmatpush.bf16.msra.mxu0 0
      %1416 = vmatpush.bf16.msra.mxu0 0
      %1417 = vmatpush.bf16.msra.mxu0 0
      %1418 = vmatpush.bf16.msra.mxu0 0
      %1419 = vmatpush.bf16.msra.mxu0 %v1410
      %1420 = vmatmul.bf16.gmra.mxu0 %v1407
      %v1421 = vpop.f32.mrf.mxu0
      %v1422 = vadd.f32 %v1403, %v1421
      %v1423 = vpop.f32.mrf.mxu0
      %1424 = vdwg.mxu0
      %s1425 = scalar_lea.vmem %s290, 104
      %v1426 = vld [vmem:[%s1425] sm:$0xf]
      %v1427 = vld [vmem:[%s1425 + $0x4] sm:$0x1]
      %v1428 = vld [vmem:[%s378] sm:$0xf]
      %v1430 = vsel %vm354, %v1426, 0
      %v1433 = vsel %vm358, %v1428, 0
      %1435 = vmatpush.bf16.msra.mxu0 0
      %1436 = vmatpush.bf16.msra.mxu0 0
      %1437 = vmatpush.bf16.msra.mxu0 0
      %1438 = vmatpush.bf16.msra.mxu0 0
      %1439 = vmatpush.bf16.msra.mxu0 0
      %1440 = vmatpush.bf16.msra.mxu0 0
      %1441 = vmatpush.bf16.msra.mxu0 0
      %1442 = vmatpush.bf16.msra.mxu0 %v1433
      %1443 = vmatmul.bf16.gmra.mxu0 %v1430
      %v1444 = vpop.f32.mrf.mxu0
      %v1445 = vadd.f32 0.0, %v1444
      %v1446 = vpop.f32.mrf.mxu0
      %1447 = vdwg.mxu0
      %v1448 = vadd.f32 %v1422, %v1445
      %v1449 = vld [vmem:[%s400] sm:$0x3]
      %v1452 = vunpack.c.l.b16 %v1426
      %v1453 = vunpack.c.l.b16 %v1427
      %v1454 = vpack.c.b16 %v1453, %v1452
      %v1456 = vshrl.u32 %v1454, 16
      %v1458 = vshll.u32 %v1454, 16
      %v1460 = vrot.slane %v1458, 1
      %v1461 = vor.u32 %v1456, %v1460
      %v1463 = vsel %vm333, %v1461, 0
      %v1466 = vsel %vm337, %v1449, 0
      %1468 = vmatpush.bf16.msra.mxu0 0
      %1469 = vmatpush.bf16.msra.mxu0 0
      %1470 = vmatpush.bf16.msra.mxu0 0
      %1471 = vmatpush.bf16.msra.mxu0 0
      %1472 = vmatpush.bf16.msra.mxu0 0
      %1473 = vmatpush.bf16.msra.mxu0 0
      %1474 = vmatpush.bf16.msra.mxu0 0
      %1475 = vmatpush.bf16.msra.mxu0 %v1466
      %1476 = vmatmul.bf16.gmra.mxu0 %v1463
      %v1477 = vpop.f32.mrf.mxu0
      %v1478 = vadd.f32 0.0, %v1477
      %v1479 = vpop.f32.mrf.mxu0
      %1480 = vdwg.mxu0
      %v1481 = vadd.f32 %v1448, %v1478
      %s1482 = scalar_lea.vmem %s290, 112
      %v1483 = vld [vmem:[%s1482] sm:$0xf]
      %v1484 = vld [vmem:[%s1482 + $0x4] sm:$0x1]
      %v1485 = vld [vmem:[%s437] sm:$0xf]
      %v1487 = vsel %vm354, %v1483, 0
      %v1490 = vsel %vm358, %v1485, 0
      %1492 = vmatpush.bf16.msra.mxu0 0
      %1493 = vmatpush.bf16.msra.mxu0 0
      %1494 = vmatpush.bf16.msra.mxu0 0
      %1495 = vmatpush.bf16.msra.mxu0 0
      %1496 = vmatpush.bf16.msra.mxu0 0
      %1497 = vmatpush.bf16.msra.mxu0 0
      %1498 = vmatpush.bf16.msra.mxu0 0
      %1499 = vmatpush.bf16.msra.mxu0 %v1490
      %1500 = vmatmul.bf16.gmra.mxu0 %v1487
      %v1501 = vpop.f32.mrf.mxu0
      %v1502 = vadd.f32 0.0, %v1501
      %v1503 = vpop.f32.mrf.mxu0
      %1504 = vdwg.mxu0
      %v1505 = vadd.f32 %v1481, %v1502
      %v1506 = vld [vmem:[%s459] sm:$0x3]
      %v1509 = vunpack.c.l.b16 %v1483
      %v1510 = vunpack.c.l.b16 %v1484
      %v1511 = vpack.c.b16 %v1510, %v1509
      %v1513 = vshrl.u32 %v1511, 16
      %v1515 = vshll.u32 %v1511, 16
      %v1517 = vrot.slane %v1515, 1
      %v1518 = vor.u32 %v1513, %v1517
      %v1520 = vsel %vm333, %v1518, 0
      %v1523 = vsel %vm337, %v1506, 0
      %1525 = vmatpush.bf16.msra.mxu0 0
      %1526 = vmatpush.bf16.msra.mxu0 0
      %1527 = vmatpush.bf16.msra.mxu0 0
      %1528 = vmatpush.bf16.msra.mxu0 0
      %1529 = vmatpush.bf16.msra.mxu0 0
      %1530 = vmatpush.bf16.msra.mxu0 0
      %1531 = vmatpush.bf16.msra.mxu0 0
      %1532 = vmatpush.bf16.msra.mxu0 %v1523
      %1533 = vmatmul.bf16.gmra.mxu0 %v1520
      %v1534 = vpop.f32.mrf.mxu0
      %v1535 = vadd.f32 0.0, %v1534
      %v1536 = vpop.f32.mrf.mxu0
      %1537 = vdwg.mxu0
      %v1538 = vadd.f32 %v1505, %v1535
      %v1539 = vadd.f32 %v1538, %v494
      %v1540 = vmul.f32 %v1539, 0.1
      %v1541 = vmax.f32 %v1539, %v1540
      %v1542 = vpack.c.bf16 %v1541, %v1541
      %s1543 = scalar_lea.vmem %s313, 24
      %1544 = vst [vmem:[%s1543] sm:$0xf] %v1542
      %v1545 = vld [vmem:[%s1482] sm:$0xf]
      %v1546 = vld [vmem:[%s1482 + $0x4] sm:$0x1]
      %v1547 = vld [vmem:[%s2] sm:$0xf]
      %v1548 = vld [vmem:[%s3] sm:$0x3]
      %v1551 = vunpack.c.l.b16 %v1545
      %v1552 = vunpack.c.l.b16 %v1546
      %v1553 = vpack.c.b16 %v1552, %v1551
      %v1555 = vshrl.u32 %v1553, 16
      %v1557 = vshll.u32 %v1553, 16
      %v1559 = vrot.slane %v1557, 1
      %v1560 = vor.u32 %v1555, %v1559
      %v1562 = vsel %vm333, %v1560, 0
      %v1565 = vsel %vm337, %v1548, 0
      %1567 = vmatpush.bf16.msra.mxu0 0
      %1568 = vmatpush.bf16.msra.mxu0 0
      %1569 = vmatpush.bf16.msra.mxu0 0
      %1570 = vmatpush.bf16.msra.mxu0 0
      %1571 = vmatpush.bf16.msra.mxu0 0
      %1572 = vmatpush.bf16.msra.mxu0 0
      %1573 = vmatpush.bf16.msra.mxu0 0
      %1574 = vmatpush.bf16.msra.mxu0 %v1565
      %1575 = vmatmul.bf16.gmra.mxu0 %v1562
      %v1576 = vpop.f32.mrf.mxu0
      %v1577 = vadd.f32 0.0, %v1576
      %v1578 = vpop.f32.mrf.mxu0
      %1579 = vdwg.mxu0
      %v1581 = vsel %vm354, %v1545, 0
      %v1584 = vsel %vm358, %v1547, 0
      %1586 = vmatpush.bf16.msra.mxu0 0
      %1587 = vmatpush.bf16.msra.mxu0 0
      %1588 = vmatpush.bf16.msra.mxu0 0
      %1589 = vmatpush.bf16.msra.mxu0 0
      %1590 = vmatpush.bf16.msra.mxu0 0
      %1591 = vmatpush.bf16.msra.mxu0 0
      %1592 = vmatpush.bf16.msra.mxu0 0
      %1593 = vmatpush.bf16.msra.mxu0 %v1584
      %1594 = vmatmul.bf16.gmra.mxu0 %v1581
      %v1595 = vpop.f32.mrf.mxu0
      %v1596 = vadd.f32 %v1577, %v1595
      %v1597 = vpop.f32.mrf.mxu0
      %1598 = vdwg.mxu0
      %s1599 = scalar_lea.vmem %s290, 120
      %v1600 = vld [vmem:[%s1599] sm:$0xf]
      %v1601 = vld [vmem:[%s1599 + $0x4] sm:$0x1]
      %v1602 = vld [vmem:[%s378] sm:$0xf]
      %v1604 = vsel %vm354, %v1600, 0
      %v1607 = vsel %vm358, %v1602, 0
      %1609 = vmatpush.bf16.msra.mxu0 0
      %1610 = vmatpush.bf16.msra.mxu0 0
      %1611 = vmatpush.bf16.msra.mxu0 0
      %1612 = vmatpush.bf16.msra.mxu0 0
      %1613 = vmatpush.bf16.msra.mxu0 0
      %1614 = vmatpush.bf16.msra.mxu0 0
      %1615 = vmatpush.bf16.msra.mxu0 0
      %1616 = vmatpush.bf16.msra.mxu0 %v1607
      %1617 = vmatmul.bf16.gmra.mxu0 %v1604
      %v1618 = vpop.f32.mrf.mxu0
      %v1619 = vadd.f32 0.0, %v1618
      %v1620 = vpop.f32.mrf.mxu0
      %1621 = vdwg.mxu0
      %v1622 = vadd.f32 %v1596, %v1619
      %v1623 = vld [vmem:[%s400] sm:$0x3]
      %v1626 = vunpack.c.l.b16 %v1600
      %v1627 = vunpack.c.l.b16 %v1601
      %v1628 = vpack.c.b16 %v1627, %v1626
      %v1630 = vshrl.u32 %v1628, 16
      %v1632 = vshll.u32 %v1628, 16
      %v1634 = vrot.slane %v1632, 1
      %v1635 = vor.u32 %v1630, %v1634
      %v1637 = vsel %vm333, %v1635, 0
      %v1640 = vsel %vm337, %v1623, 0
      %1642 = vmatpush.bf16.msra.mxu0 0
      %1643 = vmatpush.bf16.msra.mxu0 0
      %1644 = vmatpush.bf16.msra.mxu0 0
      %1645 = vmatpush.bf16.msra.mxu0 0
      %1646 = vmatpush.bf16.msra.mxu0 0
      %1647 = vmatpush.bf16.msra.mxu0 0
      %1648 = vmatpush.bf16.msra.mxu0 0
      %1649 = vmatpush.bf16.msra.mxu0 %v1640
      %1650 = vmatmul.bf16.gmra.mxu0 %v1637
      %v1651 = vpop.f32.mrf.mxu0
      %v1652 = vadd.f32 0.0, %v1651
      %v1653 = vpop.f32.mrf.mxu0
      %1654 = vdwg.mxu0
      %v1655 = vadd.f32 %v1622, %v1652
      %v1656 = vld [vmem:[%s302] sm:$0xf]
      %v1657 = vld [vmem:[%s302 + $0x4] sm:$0x1]
      %v1658 = vld [vmem:[%s437] sm:$0xf]
      %v1660 = vsel %vm354, %v1656, 0
      %v1663 = vsel %vm358, %v1658, 0
      %1665 = vmatpush.bf16.msra.mxu0 0
      %1666 = vmatpush.bf16.msra.mxu0 0
      %1667 = vmatpush.bf16.msra.mxu0 0
      %1668 = vmatpush.bf16.msra.mxu0 0
      %1669 = vmatpush.bf16.msra.mxu0 0
      %1670 = vmatpush.bf16.msra.mxu0 0
      %1671 = vmatpush.bf16.msra.mxu0 0
      %1672 = vmatpush.bf16.msra.mxu0 %v1663
      %1673 = vmatmul.bf16.gmra.mxu0 %v1660
      %v1674 = vpop.f32.mrf.mxu0
      %v1675 = vadd.f32 0.0, %v1674
      %v1676 = vpop.f32.mrf.mxu0
      %1677 = vdwg.mxu0
      %v1678 = vadd.f32 %v1655, %v1675
      %v1679 = vld [vmem:[%s459] sm:$0x3]
      %v1682 = vunpack.c.l.b16 %v1656
      %v1683 = vunpack.c.l.b16 %v1657
      %v1684 = vpack.c.b16 %v1683, %v1682
      %v1686 = vshrl.u32 %v1684, 16
      %v1688 = vshll.u32 %v1684, 16
      %v1690 = vrot.slane %v1688, 1
      %v1691 = vor.u32 %v1686, %v1690
      %v1693 = vsel %vm333, %v1691, 0
      %v1696 = vsel %vm337, %v1679, 0
      %1698 = vmatpush.bf16.msra.mxu0 0
      %1699 = vmatpush.bf16.msra.mxu0 0
      %1700 = vmatpush.bf16.msra.mxu0 0
      %1701 = vmatpush.bf16.msra.mxu0 0
      %1702 = vmatpush.bf16.msra.mxu0 0
      %1703 = vmatpush.bf16.msra.mxu0 0
      %1704 = vmatpush.bf16.msra.mxu0 0
      %1705 = vmatpush.bf16.msra.mxu0 %v1696
      %1706 = vmatmul.bf16.gmra.mxu0 %v1693
      %v1707 = vpop.f32.mrf.mxu0
      %v1708 = vadd.f32 0.0, %v1707
      %v1709 = vpop.f32.mrf.mxu0
      %1710 = vdwg.mxu0
      %v1711 = vadd.f32 %v1678, %v1708
      %v1712 = vadd.f32 %v1711, %v494
      %v1713 = vmul.f32 %v1712, 0.1
      %v1714 = vmax.f32 %v1712, %v1713
      %v1715 = vpack.c.bf16 %v1714, %v1714
      %s1716 = scalar_lea.vmem %s313, 28
      %1717 = vst [vmem:[%s1716] sm:$0xf] %v1715
      %s1718 = smul.u32 8, %s21
      %p1719 = scmp.lt.s32.totalorder %s20, 1
      %s1720 = scalar_select %p1719, %s20, 1
      %p1721 = scmp.lt.s32.totalorder %s1718, 7
      %s1722 = scalar_select %p1721, %s1718, 7
      %s1723 = smul.addr %s1720, 8
      %s1724 = sadd.s32 %s1722, %s1723
      %s1725 = smul.addr %s1724, 4
      %s1726 = scalar_lea.vmem %s5, %s1725
      // Predicated region
      $region41: #{downsampling_forward.1} parent=39 // pred_check
        %p1727 = pneg %p171
      $region42: #{downsampling_forward.1} parent=39 // pred_check_branch
        %1729 = sbr.rel (%p1727) target = $region44
      $region43: #{downsampling_forward.1} parent=39 // pred_region
        %s1730 = smul.u32 8, %s21
      $region44: #{downsampling_forward.1} parent=39 // pred_fallthru
        _
    $region40: #{downsampling_forward.1} parent=5 // pred_fallthru
      _
    %p1731 = scmp.le.s32.totalorder 2, %s11
    // Predicated region
    $region45: #{downsampling_forward.1} parent=5 // pred_check
      %p1732 = pneg %p1731
    $region46: #{downsampling_forward.1} parent=5 // pred_check_branch
      %1734 = sbr.rel (%p1732) target = $region48
    $region47: #{downsampling_forward.1} parent=5 // pred_region
      %s1735 = ssub.s32 %s11, 2
      // Predicated region
      $region49: #{downsampling_forward.1} parent=47 // pred_check
        %p1736 = pneg %p177
      $region50: #{downsampling_forward.1} parent=47 // pred_check_branch
        %1738 = sbr.rel (%p1736) target = $region52
      $region51: #{downsampling_forward.1} parent=47 // pred_region
        %s1739 = smul.u32 8, %s23
        %p1740 = scmp.lt.s32.totalorder %s22, 1
        %s1741 = scalar_select %p1740, %s22, 1
        %p1742 = scmp.lt.s32.totalorder %s1739, 7
        %s1743 = scalar_select %p1742, %s1739, 7
        %s1744 = smul.addr %s1741, 8
        %s1745 = sadd.s32 %s1743, %s1744
        %s1746 = smul.addr %s1745, 4
        %s1747 = scalar_lea.vmem %s5, %s1746
      $region52: #{downsampling_forward.1} parent=47 // pred_fallthru
        _
    $region48: #{downsampling_forward.1} parent=5 // pred_fallthru
      _
  $region6: #{downsampling_forward.1} parent=0 // loop_footer
    %s15 = sadd.s32 1, %s11
  $region7: #{downsampling_forward.1} parent=0 // loop_footer_branch
    %10 = sbr.rel target = $region3
  $region8: #{downsampling_forward.1} parent=0 // loop_exit
    _

</llo_original>
